<compile_context>
chip_gen: v7x
topology: tpu7x:2x2x1
jax: 0.10.0
libtpu: 0.0.40
codegen_flags: <defaults>
</compile_context>

<pallas_src>
import functools

import jax
import jax.numpy as jnp
from jax import lax
from jax.experimental import pallas as pl
from jax.experimental.pallas import tpu as pltpu

_HALO = 8  # halo rows fetched below each main block (needs kh - stride <= _HALO)


def _round_up(x, m):
    return -(-int(x) // m) * m


def _vmem_bytes(shape, dtype):
    dims = list(shape)
    if dims:
        dims[-1] = _round_up(dims[-1], 128)
    if len(dims) >= 2:
        dims[-2] = _round_up(dims[-2], 8)
    num = 1
    for d in dims:
        num *= int(d)
    return num * jnp.dtype(dtype).itemsize


def _vmem_capacity_bytes(default=64 * 2**20):
    try:
        info = pltpu.get_tpu_info()
        return int(getattr(info, "vmem_capacity_bytes", default))
    except Exception:
        return default


def _dsconv_kernel(xm_ref, xh_ref, wd_ref, b1_ref, w2_ref, s2_ref, b2_ref,
                   out_ref, btile_ref, *, kh, kw, s, th, wo, rb, nb, ch):
    """One (batch, H-tile) grid step.

    xm_ref : (th*s, wp, cin)   main input rows of this tile
    xh_ref : (_HALO, wp, cin)  halo rows just below the main block
    out_ref: (th*wo, cout)     flat lane-exact output slab for this tile
    btile  : tiny scratch used only for the nb boundary output rows
    """
    b1 = b1_ref[0]          # (cin,)  folded BN1 bias
    s2 = s2_ref[0]          # (cout,) folded BN2 scale
    b2 = b2_ref[0]          # (cout,) folded BN2 bias
    w2 = w2_ref[...]        # (cin, cout) pointwise weight

    def dw_taps(src_ref, base_in, rows):
        # kh*kw taps accumulated in SSA registers (no VMEM read-modify-write).
        acc = None
        for i in range(kh):
            for j in range(kw):
                if s == 1:
                    win = src_ref[pl.ds(base_in + i, rows), pl.ds(j, wo), :]
                else:
                    # TODO(synk): space-to-phase decomposition in the wrapper
                    # would make stride>1 windows contiguous (no subsample).
                    win = src_ref[pl.ds(base_in + i, (rows - 1) * s + 1),
                                  pl.ds(j, (wo - 1) * s + 1), :]
                    win = win[::s, ::s, :]
                contrib = win.astype(jnp.float32) * wd_ref[i * kw + j]
                acc = contrib if acc is None else acc + contrib
        return acc  # (rows, wo, cin) f32

    def finish(acc, out_row0, rows):
        y1 = jnp.maximum(acc + b1, 0.0)                    # BN1 bias + ReLU
        y1 = y1.reshape(rows * wo, -1).astype(w2.dtype)    # layout-free (wo % 8 == 0)
        y2 = jnp.dot(y1, w2, preferred_element_type=jnp.float32)
        y2 = jnp.maximum(y2 * s2 + b2, 0.0)                # BN2 + ReLU
        out_ref[pl.ds(out_row0 * wo, rows * wo), :] = y2.astype(out_ref.dtype)

    # Bulk output rows: every tap window lives fully inside the main block.
    r0 = 0
    while r0 < rb:
        rows = min(ch, rb - r0)
        finish(dw_taps(xm_ref, r0 * s, rows), r0, rows)
        r0 += rows

    # Boundary output rows: need (kh - s) halo rows; assemble a tiny slab.
    if nb > 0:
        main_rows = nb * s
        halo_rows = kh - s
        btile_ref[pl.ds(0, main_rows)] = xm_ref[pl.ds(th * s - main_rows, main_rows)]
        if halo_rows > 0:
            btile_ref[pl.ds(main_rows, halo_rows)] = xh_ref[pl.ds(0, halo_rows)]
        finish(dw_taps(btile_ref, 0, nb), rb, nb)


def dsconv_forward_nhwc(x_nhwc, wd_oihw, w2_oihw, bn1, bn2, *, stride, zero_pad,
                        eps=1e-5, block_h=None, compute_dtype=jnp.bfloat16):
    """x_nhwc: (N, H, W, Cin); returns (N, Ho, Wo, Cout) in x's dtype.

    This is the recommended (copy-free) entry point for NHWC models.
    """
    n, h, w, cin = map(int, x_nhwc.shape)
    cout = int(w2_oihw.shape[0])
    kh, kw = int(wd_oihw.shape[2]), int(wd_oihw.shape[3])
    assert wd_oihw.shape[0] == cin and wd_oihw.shape[1] == 1
    assert w2_oihw.shape[1] == cin
    s = int(stride)
    zp = int(zero_pad)
    assert kh <= s + _HALO, "halo block too small for this kernel size"

    in_dt = x_nhwc.dtype
    mm_dt = jnp.dtype(compute_dtype)   # dtype of the pointwise matmul operands
    out_dt = in_dt

    hp0, wp0 = h + 2 * zp, w + 2 * zp
    ho = (hp0 - kh) // s + 1
    wo = (wp0 - kw) // s + 1
    assert ho > 0 and wo > 0

    # Align the computed output width to 8 so reshapes / stores are layout-free.
    wo_p = _round_up(wo, 8)
    wp = max(wp0, (wo_p - 1) * s + kw)

    # --- per-generation tile sizing --------------------------------------------
    vmem_cap = _vmem_capacity_bytes()
    lane_tiles = -(-cin // 128)
    # row-chunk size for register accumulation (~16 f32 vregs of accumulator)
    ch = max(1, min(16, 128 // max(1, wo_p * lane_tiles)))

    const_bytes = (_vmem_bytes((kh * kw, cin), jnp.float32)
                   + _vmem_bytes((1, cin), jnp.float32)
                   + _vmem_bytes((cin, cout), mm_dt)
                   + 2 * _vmem_bytes((1, cout), jnp.float32))
    row_in = _vmem_bytes((s, wp, cin), in_dt)    # input bytes per output row
    row_out = _vmem_bytes((wo_p, cout), out_dt)  # output bytes per output row

    if block_h is None:
        fixed = (2 * _vmem_bytes((_HALO, wp, cin), in_dt)
                 + 2 * const_bytes
                 + _vmem_bytes((2 * _HALO, wp, cin), in_dt))
        budget = max(int(0.5 * vmem_cap) - fixed, 8 * (2 * row_in + 2 * row_out))
        th = budget // (2 * row_in + 2 * row_out)
        th = min(th, max(8, (4 << 20) // max(1, row_in)))   # ~4 MiB of input / step
        th = min(th, ch * 16)                               # bound static unroll
        th = max(8, (int(th) // 8) * 8)
        th = min(th, _round_up(ho, 8))
        # keep a few grid steps so both v7x TensorCores get work at small batch
        while n * (-(-ho // th)) < 4 and th > 8:
            th -= 8
    else:
        th = min(max(8, _round_up(block_h, 8)), _round_up(ho, 8))
        th = min(th, max(8, ch * 16))

    n_t = -(-ho // th)
    th_s = th * s
    halo_step = th_s // _HALO          # th % 8 == 0  =>  exact

    # boundary-row bookkeeping (last nb output rows of a tile need halo rows)
    rb = max(0, min(th, -(-(th_s - kh + 1) // s)))
    nb = th - rb
    slab_alloc = max(1, nb * s + max(0, kh - s))

    # pad H so every main block + its halo exists; pad W for the aligned width
    hp = max(hp0, n_t * th_s + _HALO)
    xp = jnp.pad(x_nhwc, ((0, 0),
                          (zp, zp + hp - hp0),
                          (zp, zp + wp - wp0),
                          (0, 0)))

    # --- fold BatchNorms (inference-mode running stats) ------------------------
    g1, beta1, m1, v1 = [jnp.asarray(a, jnp.float32) for a in bn1]
    s1 = g1 * lax.rsqrt(v1 + eps)
    b1 = (beta1 - m1 * s1).reshape(1, cin)
    g2, beta2, m2, v2 = [jnp.asarray(a, jnp.float32) for a in bn2]
    s2v = g2 * lax.rsqrt(v2 + eps)
    s2 = s2v.reshape(1, cout)
    b2 = (beta2 - m2 * s2v).reshape(1, cout)

    # depthwise weights (kh*kw, cin) with BN1 scale folded in (kept f32, tiny)
    wd = (jnp.transpose(wd_oihw[:, 0, :, :].astype(jnp.float32), (1, 2, 0))
          * s1).reshape(kh * kw, cin)
    # pointwise weights (cin, cout); no channel padding (exact-lane output)
    w2 = jnp.transpose(w2_oihw[:, :, 0, 0].astype(jnp.float32), (1, 0)).astype(mm_dt)

    # --- VMEM budget / cost hint ------------------------------------------------
    est = (2 * (_vmem_bytes((th_s, wp, cin), in_dt)
                + _vmem_bytes((_HALO, wp, cin), in_dt))
           + 2 * _vmem_bytes((th * wo_p, cout), out_dt)
           + 2 * const_bytes
           + _vmem_bytes((slab_alloc, wp, cin), in_dt))
    vmem_limit = int(min(int(0.9 * vmem_cap),
                         max(32 * 2**20, int(est * 1.5) + (4 << 20))))

    cost = pl.CostEstimate(
        flops=int(2 * n * ho * wo * cin * (kh * kw + cout)),
        transcendentals=0,
        bytes_accessed=int(xp.size * xp.dtype.itemsize
                           + n * n_t * th * wo_p * cout * jnp.dtype(out_dt).itemsize
                           + wd.size * 4 + w2.size * jnp.dtype(mm_dt).itemsize),
    )

    kern = functools.partial(_dsconv_kernel, kh=kh, kw=kw, s=s, th=th, wo=wo_p,
                             rb=rb, nb=nb, ch=ch)

    out = pl.pallas_call(
        kern,
        out_shape=jax.ShapeDtypeStruct((n * n_t, th * wo_p, cout), out_dt),
        grid_spec=pltpu.PrefetchScalarGridSpec(
            num_scalar_prefetch=0,
            grid=(n, n_t),
            in_specs=[
                # main input rows of this H tile
                pl.BlockSpec((None, th_s, wp, cin), lambda b, t: (b, t, 0, 0)),
                # 8-row halo just below the main block (2nd view of the same array)
                pl.BlockSpec((None, _HALO, wp, cin),
                             lambda b, t: (b, (t + 1) * halo_step, 0, 0)),
                # constant operands (index maps constant => never re-fetched)
                pl.BlockSpec((kh * kw, cin), lambda b, t: (0, 0)),
                pl.BlockSpec((1, cin), lambda b, t: (0, 0)),
                pl.BlockSpec((cin, cout), lambda b, t: (0, 0)),
                pl.BlockSpec((1, cout), lambda b, t: (0, 0)),
                pl.BlockSpec((1, cout), lambda b, t: (0, 0)),
            ],
            out_specs=pl.BlockSpec((None, th * wo_p, cout),
                                   lambda b, t: (b * n_t + t, 0, 0)),
            scratch_shapes=[
                pltpu.VMEM((slab_alloc, wp, cin), in_dt),  # tiny boundary slab
            ],
        ),
        compiler_params=pltpu.CompilerParams(
            dimension_semantics=("parallel", "parallel"),
            vmem_limit_bytes=vmem_limit),
        cost_estimate=cost,
    )(xp, xp, wd, b1, w2, s2, b2)

    # (n*nT, TH*wo_p, cout) -> (n, nT*TH, wo_p, cout): free row-major reshape.
    out = out.reshape(n, n_t * th, wo_p, cout)
    if n_t * th != ho or wo_p != wo:
        out = out[:, :ho, :wo, :]
    return out


def dsconv_forward(x_nchw, wd_oihw, w2_oihw, bn1, bn2, *, stride, zero_pad,
                   eps=1e-5, block_h=None, compute_dtype=jnp.bfloat16):
    """PyTorch-layout entry point: (N, Cin, H, W) -> (N, Cout, Ho, Wo).

    Prefer dsconv_forward_nhwc in NHWC models (avoids two HBM transpose passes).
    """
    x_nhwc = jnp.transpose(x_nchw, (0, 2, 3, 1))
    y = dsconv_forward_nhwc(x_nhwc, wd_oihw, w2_oihw, bn1, bn2,
                            stride=stride, zero_pad=zero_pad, eps=eps,
                            block_h=block_h, compute_dtype=compute_dtype)
    return jnp.transpose(y, (0, 3, 1, 2)).astype(x_nchw.dtype)


def _reference(x, wd_oihw, w2_oihw, bn1, bn2, *, stride, zero_pad, eps=1e-5):
    cin = x.shape[1]
    xp = jnp.pad(x, ((0, 0), (0, 0),
                     (zero_pad, zero_pad), (zero_pad, zero_pad)))
    y = lax.conv_general_dilated(xp, wd_oihw, (stride, stride), 'VALID',
                                 feature_group_count=cin,
                                 dimension_numbers=('NCHW', 'OIHW', 'NCHW'))
    g1, b1, m1, v1 = bn1
    y = jnp.maximum((y - m1[None, :, None, None]) /
                    jnp.sqrt(v1[None, :, None, None] + eps) *
                    g1[None, :, None, None] + b1[None, :, None, None], 0.0)
    y = lax.conv_general_dilated(y, w2_oihw, (1, 1), 'VALID',
                                 dimension_numbers=('NCHW', 'OIHW', 'NCHW'))
    g2, b2, m2, v2 = bn2
    y = jnp.maximum((y - m2[None, :, None, None]) /
                    jnp.sqrt(v2[None, :, None, None] + eps) *
                    g2[None, :, None, None] + b2[None, :, None, None], 0.0)
    return y


if __name__ == "__main__":
    # Small shapes: batch=2, in_planes=4, out_planes=8, spatial=16, k=3, s=1, zp=1.
    N, CIN, COUT, H, W = 2, 4, 8, 16, 16
    KH = KW = 3
    STRIDE, ZP = 1, 1

    key = jax.random.PRNGKey(0)
    kx, kd, kp, k1, k2, k3, k4 = jax.random.split(key, 7)

    x = jax.random.normal(kx, (N, CIN, H, W), jnp.float32)
    wd = jax.random.normal(kd, (CIN, 1, KH, KW), jnp.float32) * 0.2   # depthwise OIHW
    w2 = jax.random.normal(kp, (COUT, CIN, 1, 1), jnp.float32) * 0.2  # pointwise OIHW

    # Inference-mode (running-stats) BatchNorm parameters (gamma, beta, mean, var).
    bn1 = (1.0 + 0.1 * jax.random.normal(k1, (CIN,), jnp.float32),
           0.1 * jax.random.normal(k2, (CIN,), jnp.float32),
           0.05 * jax.random.normal(k3, (CIN,), jnp.float32),
           1.0 + 0.1 * jnp.abs(jax.random.normal(k4, (CIN,), jnp.float32)))
    k5, k6, k7, k8 = jax.random.split(k4, 4)
    bn2 = (1.0 + 0.1 * jax.random.normal(k5, (COUT,), jnp.float32),
           0.1 * jax.random.normal(k6, (COUT,), jnp.float32),
           0.05 * jax.random.normal(k7, (COUT,), jnp.float32),
           1.0 + 0.1 * jnp.abs(jax.random.normal(k8, (COUT,), jnp.float32)))

    ref = jax.block_until_ready(
        _reference(x, wd, w2, bn1, bn2, stride=STRIDE, zero_pad=ZP))

    # f32 matmul path, block_h=8 => 2 H-tiles per image (exercises the halo /
    # boundary-row path and a 2x2 "parallel" grid).
    out_f32 = jax.block_until_ready(
        dsconv_forward(x, wd, w2, bn1, bn2, stride=STRIDE, zero_pad=ZP,
                       compute_dtype=jnp.float32, block_h=8))
    assert out_f32.shape == ref.shape, (out_f32.shape, ref.shape)
    err32 = float(jnp.max(jnp.abs(out_f32 - ref)))
    assert jnp.allclose(out_f32, ref, atol=1e-3, rtol=1e-3), err32

    # default bf16 pointwise path with auto tile selection.
    out_bf16 = jax.block_until_ready(
        dsconv_forward(x, wd, w2, bn1, bn2, stride=STRIDE, zero_pad=ZP))
    errbf = float(jnp.max(jnp.abs(out_bf16 - ref)))
    assert jnp.allclose(out_bf16, ref, atol=7e-2, rtol=7e-2), errbf

    print("KERNEL_OK")
</pallas_src>

<mosaic_0001>
module attributes {stable_mosaic.version = 11 : i64} {
  func.func @_dsconv_kernel(%arg0: i32, %arg1: i32, %arg2: memref<1x8x18x4xf32, #tpu.memory_space<vmem>>, %arg3: memref<1x8x18x4xf32, #tpu.memory_space<vmem>>, %arg4: memref<9x4xf32, #tpu.memory_space<vmem>>, %arg5: memref<1x4xf32, #tpu.memory_space<vmem>>, %arg6: memref<4x8xf32, #tpu.memory_space<vmem>>, %arg7: memref<1x8xf32, #tpu.memory_space<vmem>>, %arg8: memref<1x8xf32, #tpu.memory_space<vmem>>, %arg9: memref<1x128x8xf32, #tpu.memory_space<vmem>>, %arg10: memref<4x18x4xf32, #tpu.memory_space<vmem>>) attributes {dimension_semantics = [#tpu.dimension_semantics<parallel>, #tpu.dimension_semantics<parallel>], iteration_bounds = array<i64: 2, 2>, scalar_prefetch = 0 : i64, scratch_operands = 1 : i64, tpu.core_type = #tpu.core_type<tc>, window_params = [{transform_indices = @transform_0, window_bounds = array<i64: 1, 8, 18, 4>}, {transform_indices = @transform_1, window_bounds = array<i64: 1, 8, 18, 4>}, {pipeline_mode = #tpu.pipeline_mode<synchronous>, transform_indices = @transform_2, window_bounds = array<i64: 9, 4>}, {pipeline_mode = #tpu.pipeline_mode<synchronous>, transform_indices = @transform_3, window_bounds = array<i64: 1, 4>}, {pipeline_mode = #tpu.pipeline_mode<synchronous>, transform_indices = @transform_4, window_bounds = array<i64: 4, 8>}, {pipeline_mode = #tpu.pipeline_mode<synchronous>, transform_indices = @transform_5, window_bounds = array<i64: 1, 8>}, {pipeline_mode = #tpu.pipeline_mode<synchronous>, transform_indices = @transform_6, window_bounds = array<i64: 1, 8>}, {transform_indices = @transform_7, window_bounds = array<i64: 1, 128, 8>}]} {
    %c0 = arith.constant 0 : index
    %c0_0 = arith.constant 0 : index
    %0 = vector.load %arg5[%c0, %c0_0] : memref<1x4xf32, #tpu.memory_space<vmem>>, vector<1x4xf32>
    %1 = vector.shape_cast %0 : vector<1x4xf32> to vector<4xf32>
    %c0_1 = arith.constant 0 : index
    %c0_2 = arith.constant 0 : index
    %2 = vector.load %arg7[%c0_1, %c0_2] : memref<1x8xf32, #tpu.memory_space<vmem>>, vector<1x8xf32>
    %3 = vector.shape_cast %2 : vector<1x8xf32> to vector<8xf32>
    %c0_3 = arith.constant 0 : index
    %c0_4 = arith.constant 0 : index
    %4 = vector.load %arg8[%c0_3, %c0_4] : memref<1x8xf32, #tpu.memory_space<vmem>>, vector<1x8xf32>
    %5 = vector.shape_cast %4 : vector<1x8xf32> to vector<8xf32>
    %c0_5 = arith.constant 0 : index
    %c0_6 = arith.constant 0 : index
    %6 = vector.load %arg6[%c0_5, %c0_6] : memref<4x8xf32, #tpu.memory_space<vmem>>, vector<4x8xf32>
    %c0_7 = arith.constant 0 : index
    %c0_8 = arith.constant 0 : index
    %c0_9 = arith.constant 0 : index
    %c0_10 = arith.constant 0 : index
    %7 = vector.load %arg2[%c0_7, %c0_8, %c0_9, %c0_10] : memref<1x8x18x4xf32, #tpu.memory_space<vmem>>, vector<1x6x16x4xf32>
    %8 = vector.shape_cast %7 : vector<1x6x16x4xf32> to vector<6x16x4xf32>
    %c0_11 = arith.constant 0 : index
    %c0_12 = arith.constant 0 : index
    %9 = vector.load %arg4[%c0_11, %c0_12] : memref<9x4xf32, #tpu.memory_space<vmem>>, vector<1x4xf32>
    %10 = vector.shape_cast %9 : vector<1x4xf32> to vector<4xf32>
    %11 = vector.shape_cast %10 : vector<4xf32> to vector<1x1x4xf32>
    %12 = vector.broadcast %11 : vector<1x1x4xf32> to vector<6x16x4xf32>
    %13 = arith.mulf %8, %12 : vector<6x16x4xf32>
    %c0_13 = arith.constant 0 : index
    %c0_14 = arith.constant 0 : index
    %c1 = arith.constant 1 : index
    %c0_15 = arith.constant 0 : index
    %14 = vector.load %arg2[%c0_13, %c0_14, %c1, %c0_15] : memref<1x8x18x4xf32, #tpu.memory_space<vmem>>, vector<1x6x16x4xf32>
    %15 = vector.shape_cast %14 : vector<1x6x16x4xf32> to vector<6x16x4xf32>
    %c1_16 = arith.constant 1 : index
    %c0_17 = arith.constant 0 : index
    %16 = vector.load %arg4[%c1_16, %c0_17] : memref<9x4xf32, #tpu.memory_space<vmem>>, vector<1x4xf32>
    %17 = vector.shape_cast %16 : vector<1x4xf32> to vector<4xf32>
    %18 = vector.shape_cast %17 : vector<4xf32> to vector<1x1x4xf32>
    %19 = vector.broadcast %18 : vector<1x1x4xf32> to vector<6x16x4xf32>
    %20 = arith.mulf %15, %19 : vector<6x16x4xf32>
    %21 = arith.addf %13, %20 : vector<6x16x4xf32>
    %c0_18 = arith.constant 0 : index
    %c0_19 = arith.constant 0 : index
    %c2 = arith.constant 2 : index
    %c0_20 = arith.constant 0 : index
    %22 = vector.load %arg2[%c0_18, %c0_19, %c2, %c0_20] : memref<1x8x18x4xf32, #tpu.memory_space<vmem>>, vector<1x6x16x4xf32>
    %23 = vector.shape_cast %22 : vector<1x6x16x4xf32> to vector<6x16x4xf32>
    %c2_21 = arith.constant 2 : index
    %c0_22 = arith.constant 0 : index
    %24 = vector.load %arg4[%c2_21, %c0_22] : memref<9x4xf32, #tpu.memory_space<vmem>>, vector<1x4xf32>
    %25 = vector.shape_cast %24 : vector<1x4xf32> to vector<4xf32>
    %26 = vector.shape_cast %25 : vector<4xf32> to vector<1x1x4xf32>
    %27 = vector.broadcast %26 : vector<1x1x4xf32> to vector<6x16x4xf32>
    %28 = arith.mulf %23, %27 : vector<6x16x4xf32>
    %29 = arith.addf %21, %28 : vector<6x16x4xf32>
    %c0_23 = arith.constant 0 : index
    %c1_24 = arith.constant 1 : index
    %c0_25 = arith.constant 0 : index
    %c0_26 = arith.constant 0 : index
    %30 = vector.load %arg2[%c0_23, %c1_24, %c0_25, %c0_26] : memref<1x8x18x4xf32, #tpu.memory_space<vmem>>, vector<1x6x16x4xf32>
    %31 = vector.shape_cast %30 : vector<1x6x16x4xf32> to vector<6x16x4xf32>
    %c3 = arith.constant 3 : index
    %c0_27 = arith.constant 0 : index
    %32 = vector.load %arg4[%c3, %c0_27] : memref<9x4xf32, #tpu.memory_space<vmem>>, vector<1x4xf32>
    %33 = vector.shape_cast %32 : vector<1x4xf32> to vector<4xf32>
    %34 = vector.shape_cast %33 : vector<4xf32> to vector<1x1x4xf32>
    %35 = vector.broadcast %34 : vector<1x1x4xf32> to vector<6x16x4xf32>
    %36 = arith.mulf %31, %35 : vector<6x16x4xf32>
    %37 = arith.addf %29, %36 : vector<6x16x4xf32>
    %c0_28 = arith.constant 0 : index
    %c1_29 = arith.constant 1 : index
    %c1_30 = arith.constant 1 : index
    %c0_31 = arith.constant 0 : index
    %38 = vector.load %arg2[%c0_28, %c1_29, %c1_30, %c0_31] : memref<1x8x18x4xf32, #tpu.memory_space<vmem>>, vector<1x6x16x4xf32>
    %39 = vector.shape_cast %38 : vector<1x6x16x4xf32> to vector<6x16x4xf32>
    %c4 = arith.constant 4 : index
    %c0_32 = arith.constant 0 : index
    %40 = vector.load %arg4[%c4, %c0_32] : memref<9x4xf32, #tpu.memory_space<vmem>>, vector<1x4xf32>
    %41 = vector.shape_cast %40 : vector<1x4xf32> to vector<4xf32>
    %42 = vector.shape_cast %41 : vector<4xf32> to vector<1x1x4xf32>
    %43 = vector.broadcast %42 : vector<1x1x4xf32> to vector<6x16x4xf32>
    %44 = arith.mulf %39, %43 : vector<6x16x4xf32>
    %45 = arith.addf %37, %44 : vector<6x16x4xf32>
    %c0_33 = arith.constant 0 : index
    %c1_34 = arith.constant 1 : index
    %c2_35 = arith.constant 2 : index
    %c0_36 = arith.constant 0 : index
    %46 = vector.load %arg2[%c0_33, %c1_34, %c2_35, %c0_36] : memref<1x8x18x4xf32, #tpu.memory_space<vmem>>, vector<1x6x16x4xf32>
    %47 = vector.shape_cast %46 : vector<1x6x16x4xf32> to vector<6x16x4xf32>
    %c5 = arith.constant 5 : index
    %c0_37 = arith.constant 0 : index
    %48 = vector.load %arg4[%c5, %c0_37] : memref<9x4xf32, #tpu.memory_space<vmem>>, vector<1x4xf32>
    %49 = vector.shape_cast %48 : vector<1x4xf32> to vector<4xf32>
    %50 = vector.shape_cast %49 : vector<4xf32> to vector<1x1x4xf32>
    %51 = vector.broadcast %50 : vector<1x1x4xf32> to vector<6x16x4xf32>
    %52 = arith.mulf %47, %51 : vector<6x16x4xf32>
    %53 = arith.addf %45, %52 : vector<6x16x4xf32>
    %c0_38 = arith.constant 0 : index
    %c2_39 = arith.constant 2 : index
    %c0_40 = arith.constant 0 : index
    %c0_41 = arith.constant 0 : index
    %54 = vector.load %arg2[%c0_38, %c2_39, %c0_40, %c0_41] : memref<1x8x18x4xf32, #tpu.memory_space<vmem>>, vector<1x6x16x4xf32>
    %55 = vector.shape_cast %54 : vector<1x6x16x4xf32> to vector<6x16x4xf32>
    %c6 = arith.constant 6 : index
    %c0_42 = arith.constant 0 : index
    %56 = vector.load %arg4[%c6, %c0_42] : memref<9x4xf32, #tpu.memory_space<vmem>>, vector<1x4xf32>
    %57 = vector.shape_cast %56 : vector<1x4xf32> to vector<4xf32>
    %58 = vector.shape_cast %57 : vector<4xf32> to vector<1x1x4xf32>
    %59 = vector.broadcast %58 : vector<1x1x4xf32> to vector<6x16x4xf32>
    %60 = arith.mulf %55, %59 : vector<6x16x4xf32>
    %61 = arith.addf %53, %60 : vector<6x16x4xf32>
    %c0_43 = arith.constant 0 : index
    %c2_44 = arith.constant 2 : index
    %c1_45 = arith.constant 1 : index
    %c0_46 = arith.constant 0 : index
    %62 = vector.load %arg2[%c0_43, %c2_44, %c1_45, %c0_46] : memref<1x8x18x4xf32, #tpu.memory_space<vmem>>, vector<1x6x16x4xf32>
    %63 = vector.shape_cast %62 : vector<1x6x16x4xf32> to vector<6x16x4xf32>
    %c7 = arith.constant 7 : index
    %c0_47 = arith.constant 0 : index
    %64 = vector.load %arg4[%c7, %c0_47] : memref<9x4xf32, #tpu.memory_space<vmem>>, vector<1x4xf32>
    %65 = vector.shape_cast %64 : vector<1x4xf32> to vector<4xf32>
    %66 = vector.shape_cast %65 : vector<4xf32> to vector<1x1x4xf32>
    %67 = vector.broadcast %66 : vector<1x1x4xf32> to vector<6x16x4xf32>
    %68 = arith.mulf %63, %67 : vector<6x16x4xf32>
    %69 = arith.addf %61, %68 : vector<6x16x4xf32>
    %c0_48 = arith.constant 0 : index
    %c2_49 = arith.constant 2 : index
    %c2_50 = arith.constant 2 : index
    %c0_51 = arith.constant 0 : index
    %70 = vector.load %arg2[%c0_48, %c2_49, %c2_50, %c0_51] : memref<1x8x18x4xf32, #tpu.memory_space<vmem>>, vector<1x6x16x4xf32>
    %71 = vector.shape_cast %70 : vector<1x6x16x4xf32> to vector<6x16x4xf32>
    %c8 = arith.constant 8 : index
    %c0_52 = arith.constant 0 : index
    %72 = vector.load %arg4[%c8, %c0_52] : memref<9x4xf32, #tpu.memory_space<vmem>>, vector<1x4xf32>
    %73 = vector.shape_cast %72 : vector<1x4xf32> to vector<4xf32>
    %74 = vector.shape_cast %73 : vector<4xf32> to vector<1x1x4xf32>
    %75 = vector.broadcast %74 : vector<1x1x4xf32> to vector<6x16x4xf32>
    %76 = arith.mulf %71, %75 : vector<6x16x4xf32>
    %77 = arith.addf %69, %76 : vector<6x16x4xf32>
    %78 = vector.shape_cast %1 : vector<4xf32> to vector<1x1x4xf32>
    %79 = vector.broadcast %78 : vector<1x1x4xf32> to vector<6x16x4xf32>
    %80 = arith.addf %77, %79 : vector<6x16x4xf32>
    %cst = arith.constant 0.000000e+00 : f32
    %81 = vector.broadcast %cst : f32 to vector<6x16x4xf32>
    %82 = arith.maximumf %80, %81 : vector<6x16x4xf32>
    %83 = vector.shape_cast %82 : vector<6x16x4xf32> to vector<96x4xf32>
    %cst_53 = arith.constant dense<0.000000e+00> : vector<96x8xf32>
    %84 = tpu.matmul %83, %6, %cst_53 {dimension_numbers = #tpu.dot_dimension_numbers<[1], [0], [0], [1], [0, 0, 1, 1], [], []>} : vector<96x4xf32>, vector<4x8xf32>, vector<96x8xf32> -> vector<96x8xf32>
    %85 = vector.shape_cast %3 : vector<8xf32> to vector<1x8xf32>
    %86 = vector.broadcast %85 : vector<1x8xf32> to vector<96x8xf32>
    %87 = arith.mulf %84, %86 : vector<96x8xf32>
    %88 = vector.shape_cast %5 : vector<8xf32> to vector<1x8xf32>
    %89 = vector.broadcast %88 : vector<1x8xf32> to vector<96x8xf32>
    %90 = arith.addf %87, %89 : vector<96x8xf32>
    %cst_54 = arith.constant 0.000000e+00 : f32
    %91 = vector.broadcast %cst_54 : f32 to vector<96x8xf32>
    %92 = arith.maximumf %90, %91 : vector<96x8xf32>
    %c0_55 = arith.constant 0 : index
    %c0_56 = arith.constant 0 : index
    %c0_57 = arith.constant 0 : index
    %93 = vector.load %arg9[%c0_55, %c0_56, %c0_57] : memref<1x128x8xf32, #tpu.memory_space<vmem>>, vector<1x96x8xf32>
    %94 = vector.shape_cast %93 : vector<1x96x8xf32> to vector<96x8xf32>
    %95 = vector.shape_cast %92 : vector<96x8xf32> to vector<1x96x8xf32>
    tpu.vector_store %arg9[%c0_55, %c0_56, %c0_57], %95 {strides = array<i32>} : memref<1x128x8xf32, #tpu.memory_space<vmem>>, vector<1x96x8xf32>,
    %c0_58 = arith.constant 0 : index
    %c6_59 = arith.constant 6 : index
    %c0_60 = arith.constant 0 : index
    %c0_61 = arith.constant 0 : index
    %96 = vector.load %arg2[%c0_58, %c6_59, %c0_60, %c0_61] : memref<1x8x18x4xf32, #tpu.memory_space<vmem>>, vector<1x2x18x4xf32>
    %97 = vector.shape_cast %96 : vector<1x2x18x4xf32> to vector<2x18x4xf32>
    %c0_62 = arith.constant 0 : index
    %c0_63 = arith.constant 0 : index
    %c0_64 = arith.constant 0 : index
    %98 = vector.load %arg10[%c0_62, %c0_63, %c0_64] : memref<4x18x4xf32, #tpu.memory_space<vmem>>, vector<2x18x4xf32>
    tpu.vector_store %arg10[%c0_62, %c0_63, %c0_64], %97 {strides = array<i32>} : memref<4x18x4xf32, #tpu.memory_space<vmem>>, vector<2x18x4xf32>,
    %c0_65 = arith.constant 0 : index
    %c0_66 = arith.constant 0 : index
    %c0_67 = arith.constant 0 : index
    %c0_68 = arith.constant 0 : index
    %99 = vector.load %arg3[%c0_65, %c0_66, %c0_67, %c0_68] : memref<1x8x18x4xf32, #tpu.memory_space<vmem>>, vector<1x2x18x4xf32>
    %100 = vector.shape_cast %99 : vector<1x2x18x4xf32> to vector<2x18x4xf32>
    %c2_69 = arith.constant 2 : index
    %c0_70 = arith.constant 0 : index
    %c0_71 = arith.constant 0 : index
    %101 = vector.load %arg10[%c2_69, %c0_70, %c0_71] : memref<4x18x4xf32, #tpu.memory_space<vmem>>, vector<2x18x4xf32>
    tpu.vector_store %arg10[%c2_69, %c0_70, %c0_71], %100 {strides = array<i32>} : memref<4x18x4xf32, #tpu.memory_space<vmem>>, vector<2x18x4xf32>,
    %c0_72 = arith.constant 0 : index
    %c0_73 = arith.constant 0 : index
    %c0_74 = arith.constant 0 : index
    %102 = vector.load %arg10[%c0_72, %c0_73, %c0_74] : memref<4x18x4xf32, #tpu.memory_space<vmem>>, vector<2x16x4xf32>
    %c0_75 = arith.constant 0 : index
    %c0_76 = arith.constant 0 : index
    %103 = vector.load %arg4[%c0_75, %c0_76] : memref<9x4xf32, #tpu.memory_space<vmem>>, vector<1x4xf32>
    %104 = vector.shape_cast %103 : vector<1x4xf32> to vector<4xf32>
    %105 = vector.shape_cast %104 : vector<4xf32> to vector<1x1x4xf32>
    %106 = vector.broadcast %105 : vector<1x1x4xf32> to vector<2x16x4xf32>
    %107 = arith.mulf %102, %106 : vector<2x16x4xf32>
    %c0_77 = arith.constant 0 : index
    %c1_78 = arith.constant 1 : index
    %c0_79 = arith.constant 0 : index
    %108 = vector.load %arg10[%c0_77, %c1_78, %c0_79] : memref<4x18x4xf32, #tpu.memory_space<vmem>>, vector<2x16x4xf32>
    %c1_80 = arith.constant 1 : index
    %c0_81 = arith.constant 0 : index
    %109 = vector.load %arg4[%c1_80, %c0_81] : memref<9x4xf32, #tpu.memory_space<vmem>>, vector<1x4xf32>
    %110 = vector.shape_cast %109 : vector<1x4xf32> to vector<4xf32>
    %111 = vector.shape_cast %110 : vector<4xf32> to vector<1x1x4xf32>
    %112 = vector.broadcast %111 : vector<1x1x4xf32> to vector<2x16x4xf32>
    %113 = arith.mulf %108, %112 : vector<2x16x4xf32>
    %114 = arith.addf %107, %113 : vector<2x16x4xf32>
    %c0_82 = arith.constant 0 : index
    %c2_83 = arith.constant 2 : index
    %c0_84 = arith.constant 0 : index
    %115 = vector.load %arg10[%c0_82, %c2_83, %c0_84] : memref<4x18x4xf32, #tpu.memory_space<vmem>>, vector<2x16x4xf32>
    %c2_85 = arith.constant 2 : index
    %c0_86 = arith.constant 0 : index
    %116 = vector.load %arg4[%c2_85, %c0_86] : memref<9x4xf32, #tpu.memory_space<vmem>>, vector<1x4xf32>
    %117 = vector.shape_cast %116 : vector<1x4xf32> to vector<4xf32>
    %118 = vector.shape_cast %117 : vector<4xf32> to vector<1x1x4xf32>
    %119 = vector.broadcast %118 : vector<1x1x4xf32> to vector<2x16x4xf32>
    %120 = arith.mulf %115, %119 : vector<2x16x4xf32>
    %121 = arith.addf %114, %120 : vector<2x16x4xf32>
    %c1_87 = arith.constant 1 : index
    %c0_88 = arith.constant 0 : index
    %c0_89 = arith.constant 0 : index
    %122 = vector.load %arg10[%c1_87, %c0_88, %c0_89] : memref<4x18x4xf32, #tpu.memory_space<vmem>>, vector<2x16x4xf32>
    %c3_90 = arith.constant 3 : index
    %c0_91 = arith.constant 0 : index
    %123 = vector.load %arg4[%c3_90, %c0_91] : memref<9x4xf32, #tpu.memory_space<vmem>>, vector<1x4xf32>
    %124 = vector.shape_cast %123 : vector<1x4xf32> to vector<4xf32>
    %125 = vector.shape_cast %124 : vector<4xf32> to vector<1x1x4xf32>
    %126 = vector.broadcast %125 : vector<1x1x4xf32> to vector<2x16x4xf32>
    %127 = arith.mulf %122, %126 : vector<2x16x4xf32>
    %128 = arith.addf %121, %127 : vector<2x16x4xf32>
    %c1_92 = arith.constant 1 : index
    %c1_93 = arith.constant 1 : index
    %c0_94 = arith.constant 0 : index
    %129 = vector.load %arg10[%c1_92, %c1_93, %c0_94] : memref<4x18x4xf32, #tpu.memory_space<vmem>>, vector<2x16x4xf32>
    %c4_95 = arith.constant 4 : index
    %c0_96 = arith.constant 0 : index
    %130 = vector.load %arg4[%c4_95, %c0_96] : memref<9x4xf32, #tpu.memory_space<vmem>>, vector<1x4xf32>
    %131 = vector.shape_cast %130 : vector<1x4xf32> to vector<4xf32>
    %132 = vector.shape_cast %131 : vector<4xf32> to vector<1x1x4xf32>
    %133 = vector.broadcast %132 : vector<1x1x4xf32> to vector<2x16x4xf32>
    %134 = arith.mulf %129, %133 : vector<2x16x4xf32>
    %135 = arith.addf %128, %134 : vector<2x16x4xf32>
    %c1_97 = arith.constant 1 : index
    %c2_98 = arith.constant 2 : index
    %c0_99 = arith.constant 0 : index
    %136 = vector.load %arg10[%c1_97, %c2_98, %c0_99] : memref<4x18x4xf32, #tpu.memory_space<vmem>>, vector<2x16x4xf32>
    %c5_100 = arith.constant 5 : index
    %c0_101 = arith.constant 0 : index
    %137 = vector.load %arg4[%c5_100, %c0_101] : memref<9x4xf32, #tpu.memory_space<vmem>>, vector<1x4xf32>
    %138 = vector.shape_cast %137 : vector<1x4xf32> to vector<4xf32>
    %139 = vector.shape_cast %138 : vector<4xf32> to vector<1x1x4xf32>
    %140 = vector.broadcast %139 : vector<1x1x4xf32> to vector<2x16x4xf32>
    %141 = arith.mulf %136, %140 : vector<2x16x4xf32>
    %142 = arith.addf %135, %141 : vector<2x16x4xf32>
    %c2_102 = arith.constant 2 : index
    %c0_103 = arith.constant 0 : index
    %c0_104 = arith.constant 0 : index
    %143 = vector.load %arg10[%c2_102, %c0_103, %c0_104] : memref<4x18x4xf32, #tpu.memory_space<vmem>>, vector<2x16x4xf32>
    %c6_105 = arith.constant 6 : index
    %c0_106 = arith.constant 0 : index
    %144 = vector.load %arg4[%c6_105, %c0_106] : memref<9x4xf32, #tpu.memory_space<vmem>>, vector<1x4xf32>
    %145 = vector.shape_cast %144 : vector<1x4xf32> to vector<4xf32>
    %146 = vector.shape_cast %145 : vector<4xf32> to vector<1x1x4xf32>
    %147 = vector.broadcast %146 : vector<1x1x4xf32> to vector<2x16x4xf32>
    %148 = arith.mulf %143, %147 : vector<2x16x4xf32>
    %149 = arith.addf %142, %148 : vector<2x16x4xf32>
    %c2_107 = arith.constant 2 : index
    %c1_108 = arith.constant 1 : index
    %c0_109 = arith.constant 0 : index
    %150 = vector.load %arg10[%c2_107, %c1_108, %c0_109] : memref<4x18x4xf32, #tpu.memory_space<vmem>>, vector<2x16x4xf32>
    %c7_110 = arith.constant 7 : index
    %c0_111 = arith.constant 0 : index
    %151 = vector.load %arg4[%c7_110, %c0_111] : memref<9x4xf32, #tpu.memory_space<vmem>>, vector<1x4xf32>
    %152 = vector.shape_cast %151 : vector<1x4xf32> to vector<4xf32>
    %153 = vector.shape_cast %152 : vector<4xf32> to vector<1x1x4xf32>
    %154 = vector.broadcast %153 : vector<1x1x4xf32> to vector<2x16x4xf32>
    %155 = arith.mulf %150, %154 : vector<2x16x4xf32>
    %156 = arith.addf %149, %155 : vector<2x16x4xf32>
    %c2_112 = arith.constant 2 : index
    %c2_113 = arith.constant 2 : index
    %c0_114 = arith.constant 0 : index
    %157 = vector.load %arg10[%c2_112, %c2_113, %c0_114] : memref<4x18x4xf32, #tpu.memory_space<vmem>>, vector<2x16x4xf32>
    %c8_115 = arith.constant 8 : index
    %c0_116 = arith.constant 0 : index
    %158 = vector.load %arg4[%c8_115, %c0_116] : memref<9x4xf32, #tpu.memory_space<vmem>>, vector<1x4xf32>
    %159 = vector.shape_cast %158 : vector<1x4xf32> to vector<4xf32>
    %160 = vector.shape_cast %159 : vector<4xf32> to vector<1x1x4xf32>
    %161 = vector.broadcast %160 : vector<1x1x4xf32> to vector<2x16x4xf32>
    %162 = arith.mulf %157, %161 : vector<2x16x4xf32>
    %163 = arith.addf %156, %162 : vector<2x16x4xf32>
    %164 = vector.shape_cast %1 : vector<4xf32> to vector<1x1x4xf32>
    %165 = vector.broadcast %164 : vector<1x1x4xf32> to vector<2x16x4xf32>
    %166 = arith.addf %163, %165 : vector<2x16x4xf32>
    %cst_117 = arith.constant 0.000000e+00 : f32
    %167 = vector.broadcast %cst_117 : f32 to vector<2x16x4xf32>
    %168 = arith.maximumf %166, %167 : vector<2x16x4xf32>
    %169 = vector.shape_cast %168 : vector<2x16x4xf32> to vector<32x4xf32>
    %cst_118 = arith.constant dense<0.000000e+00> : vector<32x8xf32>
    %170 = tpu.matmul %169, %6, %cst_118 {dimension_numbers = #tpu.dot_dimension_numbers<[1], [0], [0], [1], [0, 0, 1, 1], [], []>} : vector<32x4xf32>, vector<4x8xf32>, vector<32x8xf32> -> vector<32x8xf32>
    %171 = vector.shape_cast %3 : vector<8xf32> to vector<1x8xf32>
    %172 = vector.broadcast %171 : vector<1x8xf32> to vector<32x8xf32>
    %173 = arith.mulf %170, %172 : vector<32x8xf32>
    %174 = vector.shape_cast %5 : vector<8xf32> to vector<1x8xf32>
    %175 = vector.broadcast %174 : vector<1x8xf32> to vector<32x8xf32>
    %176 = arith.addf %173, %175 : vector<32x8xf32>
    %cst_119 = arith.constant 0.000000e+00 : f32
    %177 = vector.broadcast %cst_119 : f32 to vector<32x8xf32>
    %178 = arith.maximumf %176, %177 : vector<32x8xf32>
    %c0_120 = arith.constant 0 : index
    %c96 = arith.constant 96 : index
    %c0_121 = arith.constant 0 : index
    %179 = vector.load %arg9[%c0_120, %c96, %c0_121] : memref<1x128x8xf32, #tpu.memory_space<vmem>>, vector<1x32x8xf32>
    %180 = vector.shape_cast %179 : vector<1x32x8xf32> to vector<32x8xf32>
    %181 = vector.shape_cast %178 : vector<32x8xf32> to vector<1x32x8xf32>
    tpu.vector_store %arg9[%c0_120, %c96, %c0_121], %181 {strides = array<i32>} : memref<1x128x8xf32, #tpu.memory_space<vmem>>, vector<1x32x8xf32>,
    return
  }
  func.func @transform_0(%arg0: i32, %arg1: i32) -> (i32, i32, i32, i32) {
    %c0_i32 = arith.constant 0 : i32
    %c0_i32_0 = arith.constant 0 : i32
    %c0_i32_1 = arith.constant 0 : i32
    return %arg0, %arg1, %c0_i32, %c0_i32_0 : i32, i32, i32, i32
  }
  func.func @transform_1(%arg0: i32, %arg1: i32) -> (i32, i32, i32, i32) {
    %c1_i32 = arith.constant 1 : i32
    %0 = arith.addi %arg1, %c1_i32 : i32
    %c1_i32_0 = arith.constant 1 : i32
    %1 = arith.muli %0, %c1_i32_0 : i32
    %c0_i32 = arith.constant 0 : i32
    %c0_i32_1 = arith.constant 0 : i32
    %c0_i32_2 = arith.constant 0 : i32
    return %arg0, %1, %c0_i32, %c0_i32_1 : i32, i32, i32, i32
  }
  func.func @transform_2(%arg0: i32, %arg1: i32) -> (i32, i32) {
    %c0_i32 = arith.constant 0 : i32
    %c0_i32_0 = arith.constant 0 : i32
    %c0_i32_1 = arith.constant 0 : i32
    return %c0_i32, %c0_i32_0 : i32, i32
  }
  func.func @transform_3(%arg0: i32, %arg1: i32) -> (i32, i32) {
    %c0_i32 = arith.constant 0 : i32
    %c0_i32_0 = arith.constant 0 : i32
    %c0_i32_1 = arith.constant 0 : i32
    return %c0_i32, %c0_i32_0 : i32, i32
  }
  func.func @transform_4(%arg0: i32, %arg1: i32) -> (i32, i32) {
    %c0_i32 = arith.constant 0 : i32
    %c0_i32_0 = arith.constant 0 : i32
    %c0_i32_1 = arith.constant 0 : i32
    return %c0_i32, %c0_i32_0 : i32, i32
  }
  func.func @transform_5(%arg0: i32, %arg1: i32) -> (i32, i32) {
    %c0_i32 = arith.constant 0 : i32
    %c0_i32_0 = arith.constant 0 : i32
    %c0_i32_1 = arith.constant 0 : i32
    return %c0_i32, %c0_i32_0 : i32, i32
  }
  func.func @transform_6(%arg0: i32, %arg1: i32) -> (i32, i32) {
    %c0_i32 = arith.constant 0 : i32
    %c0_i32_0 = arith.constant 0 : i32
    %c0_i32_1 = arith.constant 0 : i32
    return %c0_i32, %c0_i32_0 : i32, i32
  }
  func.func @transform_7(%arg0: i32, %arg1: i32) -> (i32, i32, i32) {
    %c2_i32 = arith.constant 2 : i32
    %0 = arith.muli %arg0, %c2_i32 : i32
    %1 = arith.addi %0, %arg1 : i32
    %c0_i32 = arith.constant 0 : i32
    %c0_i32_0 = arith.constant 0 : i32
    %c0_i32_1 = arith.constant 0 : i32
    return %1, %c0_i32, %c0_i32_0 : i32, i32, i32
  }
}

</mosaic_0001>

<llo_original>
// kernel: tpu_custom_call.1
$region0: #{tpu_custom_call.1}
  #allocation0 [shape = 'u32[]', space=smem, size = 0x4, offset = 0x4, fixed_abs, tag = 'smem constant byte address 0x4 - core index']
  #allocation1 [shape = 'u32[144,128]{1,0:T(1,128)}', space=vmem, size = 0x12000, scoped, tag = 'internal scratch']
  #allocation2 [shape = 'f32[4,18,4]{2,1,0:T(8,128)}', space=vmem, size = 0xc000, scoped, tag = 'scratch operand']
  %s0 = inlined_call_operand.vmem [shape: f32[2,24,18,4], index: 0, kind: input, shape index: {}]
  %s1 = inlined_call_operand.vmem [shape: f32[2,24,18,4], index: 1, kind: input, shape index: {}]
  %s2 = inlined_call_operand.vmem [shape: f32[9,4], index: 2, kind: input, shape index: {}]
  %s3 = inlined_call_operand.vmem [shape: f32[1,4], index: 3, kind: input, shape index: {}]
  %s4 = inlined_call_operand.vmem [shape: f32[4,8], index: 4, kind: input, shape index: {}]
  %s5 = inlined_call_operand.vmem [shape: f32[1,8], index: 5, kind: input, shape index: {}]
  %s6 = inlined_call_operand.vmem [shape: f32[1,8], index: 6, kind: input, shape index: {}]
  %s7 = inlined_call_operand.vmem [shape: f32[4,128,8], index: 7, kind: output, shape index: {}]
  %s8 = sld [smem:[#allocation0]]
  $region61: #{tpu_custom_call.1} parent=0
    _
  %s10 = ssub.s32 1, %s8
  %s11 = scalar_select 0, %s10, %s8
  loop: start=0, step=1, limit=6
  $region2: #{tpu_custom_call.1} parent=0 // loop_pre_header
    _
  $region3: #{tpu_custom_call.1} parent=0 // loop_header
    %s13 = sphi 0, %s17
    %p14 = scmp.ge.s32.totalorder %s13, 6
    %s20 = sphi 0, %s32
    %s21 = sphi 0, %s28
    %s22 = sphi 0, %s20
    %s23 = sphi 0, %s21
    %s24 = sphi 0, %s22
    %s25 = sphi 0, %s23
    %s37 = sphi 0, %s39
    %s40 = sphi 0, %s37
    %s41 = sphi 0, %s40
    %s57 = sphi 0, %s41
    %s67 = sphi 0, %s69
    %s70 = sphi 0, %s67
    %s71 = sphi 0, %s70
    %s87 = sphi 0, %s71
    %s91 = sphi 0, %s91
    %s93 = sphi 0, %s91
    %s94 = sphi 0, %s93
    %s108 = sphi 0, %s94
    %s112 = sphi 0, %s112
    %s114 = sphi 0, %s112
    %s115 = sphi 0, %s114
    %s129 = sphi 0, %s115
    %s133 = sphi 0, %s133
    %s135 = sphi 0, %s133
    %s136 = sphi 0, %s135
    %s150 = sphi 0, %s136
    %s154 = sphi 0, %s154
    %s156 = sphi 0, %s154
    %s157 = sphi 0, %s156
    %s171 = sphi 0, %s157
    %s175 = sphi 0, %s175
    %s177 = sphi 0, %s175
    %s178 = sphi 0, %s177
    %s192 = sphi 0, %s178
    %s202 = sphi 0, %s204
    %s205 = sphi 0, %s202
    %s206 = sphi 0, %s205
    %s222 = sphi 0, %s206
  $region4: #{tpu_custom_call.1} parent=0 // loop_header_branch
    %16 = sbr.rel (%p14) target = $region8
  $region5: #{tpu_custom_call.1} parent=0 // loop_body
    %s18 = ssub.s32 %s13, 1
    %s19 = ssub.s32 %s13, 2
    %s26 = sadd.s32 1, %s21
    %p27 = scmp.ge.s32.totalorder %s26, 2
    %s28 = scalar_select %p27, 0, %s26
    %s29 = sadd.s32 1, %s20
    %s30 = scalar_select %p27, %s29, %s20
    %p31 = scmp.ge.s32.totalorder %s30, 2
    %s32 = scalar_select %p31, 0, %s30
    %s33 = ssub.s32 %s20, %s32
    %s34 = ssub.s32 %s21, %s28
    %s35 = sor.u32 %s33, %s34
    %p36 = scmp.eq.s32.totalorder %s35, 0
    %s38 = sadd.s32 %s37, 1
    %s39 = scalar_select %p36, %s37, %s38
    %p42 = pneg %p36
    %p43 = scmp.eq.s32.totalorder %s13, 3
    %p44 = por %p42, %p43
    %p45 = scmp.ne.s32.totalorder %s37, %s40
    %p46 = scmp.eq.s32.totalorder %s13, 0
    %p47 = por %p45, %p46
    %p48 = scmp.ne.s32.totalorder %s37, %s40
    %p49 = scmp.eq.s32.totalorder %s18, 3
    %p50 = por %p48, %p49
    %p51 = scmp.ne.s32.totalorder %s40, %s41
    %p52 = scmp.eq.s32.totalorder %s18, 0
    %p53 = por %p51, %p52
    %p54 = scmp.ne.s32.totalorder %s40, %s41
    %p55 = scmp.eq.s32.totalorder %s19, 3
    %p56 = por %p54, %p55
    %p58 = scmp.ne.s32.totalorder %s41, %s57
    %p59 = scmp.eq.s32.totalorder %s19, 0
    %p60 = por %p58, %p59
    %s61 = sadd.s32 %s21, 1
    %s62 = sadd.s32 %s28, 1
    %s63 = ssub.s32 %s20, %s32
    %s64 = ssub.s32 %s61, %s62
    %s65 = sor.u32 %s63, %s64
    %p66 = scmp.eq.s32.totalorder %s65, 0
    %s68 = sadd.s32 %s67, 1
    %s69 = scalar_select %p66, %s67, %s68
    %p72 = pneg %p66
    %p73 = scmp.eq.s32.totalorder %s13, 3
    %p74 = por %p72, %p73
    %p75 = scmp.ne.s32.totalorder %s67, %s70
    %p76 = scmp.eq.s32.totalorder %s13, 0
    %p77 = por %p75, %p76
    %p78 = scmp.ne.s32.totalorder %s67, %s70
    %p79 = scmp.eq.s32.totalorder %s18, 3
    %p80 = por %p78, %p79
    %p81 = scmp.ne.s32.totalorder %s70, %s71
    %p82 = scmp.eq.s32.totalorder %s18, 0
    %p83 = por %p81, %p82
    %p84 = scmp.ne.s32.totalorder %s70, %s71
    %p85 = scmp.eq.s32.totalorder %s19, 3
    %p86 = por %p84, %p85
    %p88 = scmp.ne.s32.totalorder %s71, %s87
    %p89 = scmp.eq.s32.totalorder %s19, 0
    %p90 = por %p88, %p89
    %s92 = sadd.s32 %s91, 1
    %p95 = scmp.eq.s32.totalorder %s13, 3
    %p96 = scmp.ne.s32.totalorder %s91, %s93
    %p97 = scmp.eq.s32.totalorder %s13, 0
    %p98 = por %p96, %p97
    %p99 = scmp.ne.s32.totalorder %s91, %s93
    %p100 = scmp.eq.s32.totalorder %s18, 3
    %p101 = por %p99, %p100
    %p102 = scmp.ne.s32.totalorder %s93, %s94
    %p103 = scmp.eq.s32.totalorder %s18, 0
    %p104 = por %p102, %p103
    %p105 = scmp.ne.s32.totalorder %s93, %s94
    %p106 = scmp.eq.s32.totalorder %s19, 3
    %p107 = por %p105, %p106
    %p109 = scmp.ne.s32.totalorder %s94, %s108
    %p110 = scmp.eq.s32.totalorder %s19, 0
    %p111 = por %p109, %p110
    %s113 = sadd.s32 %s112, 1
    %p116 = scmp.eq.s32.totalorder %s13, 3
    %p117 = scmp.ne.s32.totalorder %s112, %s114
    %p118 = scmp.eq.s32.totalorder %s13, 0
    %p119 = por %p117, %p118
    %p120 = scmp.ne.s32.totalorder %s112, %s114
    %p121 = scmp.eq.s32.totalorder %s18, 3
    %p122 = por %p120, %p121
    %p123 = scmp.ne.s32.totalorder %s114, %s115
    %p124 = scmp.eq.s32.totalorder %s18, 0
    %p125 = por %p123, %p124
    %p126 = scmp.ne.s32.totalorder %s114, %s115
    %p127 = scmp.eq.s32.totalorder %s19, 3
    %p128 = por %p126, %p127
    %p130 = scmp.ne.s32.totalorder %s115, %s129
    %p131 = scmp.eq.s32.totalorder %s19, 0
    %p132 = por %p130, %p131
    %s134 = sadd.s32 %s133, 1
    %p137 = scmp.eq.s32.totalorder %s13, 3
    %p138 = scmp.ne.s32.totalorder %s133, %s135
    %p139 = scmp.eq.s32.totalorder %s13, 0
    %p140 = por %p138, %p139
    %p141 = scmp.ne.s32.totalorder %s133, %s135
    %p142 = scmp.eq.s32.totalorder %s18, 3
    %p143 = por %p141, %p142
    %p144 = scmp.ne.s32.totalorder %s135, %s136
    %p145 = scmp.eq.s32.totalorder %s18, 0
    %p146 = por %p144, %p145
    %p147 = scmp.ne.s32.totalorder %s135, %s136
    %p148 = scmp.eq.s32.totalorder %s19, 3
    %p149 = por %p147, %p148
    %p151 = scmp.ne.s32.totalorder %s136, %s150
    %p152 = scmp.eq.s32.totalorder %s19, 0
    %p153 = por %p151, %p152
    %s155 = sadd.s32 %s154, 1
    %p158 = scmp.eq.s32.totalorder %s13, 3
    %p159 = scmp.ne.s32.totalorder %s154, %s156
    %p160 = scmp.eq.s32.totalorder %s13, 0
    %p161 = por %p159, %p160
    %p162 = scmp.ne.s32.totalorder %s154, %s156
    %p163 = scmp.eq.s32.totalorder %s18, 3
    %p164 = por %p162, %p163
    %p165 = scmp.ne.s32.totalorder %s156, %s157
    %p166 = scmp.eq.s32.totalorder %s18, 0
    %p167 = por %p165, %p166
    %p168 = scmp.ne.s32.totalorder %s156, %s157
    %p169 = scmp.eq.s32.totalorder %s19, 3
    %p170 = por %p168, %p169
    %p172 = scmp.ne.s32.totalorder %s157, %s171
    %p173 = scmp.eq.s32.totalorder %s19, 0
    %p174 = por %p172, %p173
    %s176 = sadd.s32 %s175, 1
    %p179 = scmp.eq.s32.totalorder %s13, 3
    %p180 = scmp.ne.s32.totalorder %s175, %s177
    %p181 = scmp.eq.s32.totalorder %s13, 0
    %p182 = por %p180, %p181
    %p183 = scmp.ne.s32.totalorder %s175, %s177
    %p184 = scmp.eq.s32.totalorder %s18, 3
    %p185 = por %p183, %p184
    %p186 = scmp.ne.s32.totalorder %s177, %s178
    %p187 = scmp.eq.s32.totalorder %s18, 0
    %p188 = por %p186, %p187
    %p189 = scmp.ne.s32.totalorder %s177, %s178
    %p190 = scmp.eq.s32.totalorder %s19, 3
    %p191 = por %p189, %p190
    %p193 = scmp.ne.s32.totalorder %s178, %s192
    %p194 = scmp.eq.s32.totalorder %s19, 0
    %p195 = por %p193, %p194
    %s196 = smul.u32 %s20, 2
    %s197 = sadd.s32 %s196, %s21
    %s198 = smul.u32 %s32, 2
    %s199 = sadd.s32 %s198, %s28
    %s200 = ssub.s32 %s197, %s199
    %p201 = scmp.eq.s32.totalorder %s200, 0
    %s203 = sadd.s32 %s202, 1
    %s204 = scalar_select %p201, %s202, %s203
    %p207 = pneg %p201
    %p208 = scmp.eq.s32.totalorder %s13, 3
    %p209 = por %p207, %p208
    %p210 = scmp.ne.s32.totalorder %s202, %s205
    %p211 = scmp.eq.s32.totalorder %s13, 0
    %p212 = por %p210, %p211
    %p213 = scmp.ne.s32.totalorder %s202, %s205
    %p214 = scmp.eq.s32.totalorder %s18, 3
    %p215 = por %p213, %p214
    %p216 = scmp.ne.s32.totalorder %s205, %s206
    %p217 = scmp.eq.s32.totalorder %s18, 0
    %p218 = por %p216, %p217
    %p219 = scmp.ne.s32.totalorder %s205, %s206
    %p220 = scmp.eq.s32.totalorder %s19, 3
    %p221 = por %p219, %p220
    %p223 = scmp.ne.s32.totalorder %s206, %s222
    %p224 = scmp.eq.s32.totalorder %s19, 0
    %p225 = por %p223, %p224
    %p226 = scmp.le.s32.totalorder 1, %s13
    %p227 = scmp.lt.s32.totalorder %s13, 5
    %p228 = pnand %p226, %p227
    %p229 = pneg %p228
    // Predicated region
    $region9: #{tpu_custom_call.1} parent=5 // pred_check
      _
    $region10: #{tpu_custom_call.1} parent=5 // pred_check_branch
      %231 = sbr.rel (%p228) target = $region12
    $region11: #{tpu_custom_call.1} parent=5 // pred_region
      %s232 = ssub.s32 %s13, 1
      // Predicated region
      $region13: #{tpu_custom_call.1} parent=11 // pred_check
        %p233 = pneg %p104
      $region14: #{tpu_custom_call.1} parent=11 // pred_check_branch
        %235 = sbr.rel (%p233) target = $region16
      $region15: #{tpu_custom_call.1} parent=11 // pred_region
        _
      $region16: #{tpu_custom_call.1} parent=11 // pred_fallthru
        _
      // Predicated region
      $region17: #{tpu_custom_call.1} parent=11 // pred_check
        %p236 = pneg %p125
      $region18: #{tpu_custom_call.1} parent=11 // pred_check_branch
        %238 = sbr.rel (%p236) target = $region20
      $region19: #{tpu_custom_call.1} parent=11 // pred_region
        _
      $region20: #{tpu_custom_call.1} parent=11 // pred_fallthru
        _
      // Predicated region
      $region21: #{tpu_custom_call.1} parent=11 // pred_check
        %p239 = pneg %p146
      $region22: #{tpu_custom_call.1} parent=11 // pred_check_branch
        %241 = sbr.rel (%p239) target = $region24
      $region23: #{tpu_custom_call.1} parent=11 // pred_region
        _
      $region24: #{tpu_custom_call.1} parent=11 // pred_fallthru
        _
      // Predicated region
      $region25: #{tpu_custom_call.1} parent=11 // pred_check
        %p242 = pneg %p167
      $region26: #{tpu_custom_call.1} parent=11 // pred_check_branch
        %244 = sbr.rel (%p242) target = $region28
      $region27: #{tpu_custom_call.1} parent=11 // pred_region
        _
      $region28: #{tpu_custom_call.1} parent=11 // pred_fallthru
        _
      // Predicated region
      $region29: #{tpu_custom_call.1} parent=11 // pred_check
        %p245 = pneg %p188
      $region30: #{tpu_custom_call.1} parent=11 // pred_check_branch
        %247 = sbr.rel (%p245) target = $region32
      $region31: #{tpu_custom_call.1} parent=11 // pred_region
        _
      $region32: #{tpu_custom_call.1} parent=11 // pred_fallthru
        _
    $region12: #{tpu_custom_call.1} parent=5 // pred_fallthru
      _
    %p248 = scmp.lt.s32.totalorder %s13, 4
    // Predicated region
    $region33: #{tpu_custom_call.1} parent=5 // pred_check
      %p249 = pneg %p248
    $region34: #{tpu_custom_call.1} parent=5 // pred_check_branch
      %251 = sbr.rel (%p249) target = $region36
    $region35: #{tpu_custom_call.1} parent=5 // pred_region
      // Predicated region
      $region37: #{tpu_custom_call.1} parent=35 // pred_check
        %p252 = pneg %p47
      $region38: #{tpu_custom_call.1} parent=35 // pred_check_branch
        %254 = sbr.rel (%p252) target = $region40
      $region39: #{tpu_custom_call.1} parent=35 // pred_region
        %s255 = smul.u32 8, %s21
        %p256 = scmp.lt.s32.totalorder %s20, 1
        %s257 = scalar_select %p256, %s20, 1
        %p258 = scmp.lt.s32.totalorder %s255, 23
        %s259 = scalar_select %p258, %s255, 23
        %s260 = smul.addr %s259, 3
        %s261 = smul.addr %s257, 72
        %s262 = sadd.s32 %s260, %s261
        %s263 = smul.addr %s262, 8
        %s264 = scalar_lea.vmem %s0, %s263
        %s265 = smul.u32 8, %s21
      $region40: #{tpu_custom_call.1} parent=35 // pred_fallthru
        _
      // Predicated region
      $region41: #{tpu_custom_call.1} parent=35 // pred_check
        %p266 = pneg %p77
      $region42: #{tpu_custom_call.1} parent=35 // pred_check_branch
        %268 = sbr.rel (%p266) target = $region44
      $region43: #{tpu_custom_call.1} parent=35 // pred_region
        %s269 = sadd.s32 %s21, 1
        %s270 = smul.u32 8, %s269
        %p271 = scmp.lt.s32.totalorder %s20, 1
        %s272 = scalar_select %p271, %s20, 1
        %p273 = scmp.lt.s32.totalorder %s270, 23
        %s274 = scalar_select %p273, %s270, 23
        %s275 = smul.addr %s274, 3
        %s276 = smul.addr %s272, 72
        %s277 = sadd.s32 %s275, %s276
        %s278 = smul.addr %s277, 8
        %s279 = scalar_lea.vmem %s1, %s278
        %s280 = sadd.s32 %s21, 1
        %s281 = smul.u32 8, %s280
      $region44: #{tpu_custom_call.1} parent=35 // pred_fallthru
        _
    $region36: #{tpu_custom_call.1} parent=5 // pred_fallthru
      _
    %p282 = scmp.le.s32.totalorder 1, %s13
    %p283 = scmp.lt.s32.totalorder %s13, 5
    %p284 = pnand %p282, %p283
    %p285 = pneg %p284
    // Predicated region
    $region45: #{tpu_custom_call.1} parent=5 // pred_check
      _
    $region46: #{tpu_custom_call.1} parent=5 // pred_check_branch
      %287 = sbr.rel (%p284) target = $region48
    $region47: #{tpu_custom_call.1} parent=5 // pred_region
      %s288 = ssub.s32 %s13, 1
      %s289 = smul.u32 8, %s23
      %p290 = scmp.lt.s32.totalorder %s22, 1
      %s291 = scalar_select %p290, %s22, 1
      %p292 = scmp.lt.s32.totalorder %s289, 23
      %s293 = scalar_select %p292, %s289, 23
      %s294 = smul.addr %s293, 3
      %s295 = smul.addr %s291, 72
      %s296 = sadd.s32 %s294, %s295
      %s297 = smul.addr %s296, 8
      %s298 = scalar_lea.vmem %s0, %s297
      %p299 = pneg %p53
      %p300 = pneg %p50
      %s301 = sadd.s32 %s23, 1
      %s302 = smul.u32 8, %s301
      %p303 = scmp.lt.s32.totalorder %s22, 1
      %s304 = scalar_select %p303, %s22, 1
      %p305 = scmp.lt.s32.totalorder %s302, 23
      %s306 = scalar_select %p305, %s302, 23
      %s307 = smul.addr %s306, 3
      %s308 = smul.addr %s304, 72
      %s309 = sadd.s32 %s307, %s308
      %s310 = smul.addr %s309, 8
      %s311 = scalar_lea.vmem %s1, %s310
      %p312 = pneg %p83
      %p313 = pneg %p80
      %p314 = pneg %p104
      %p315 = pneg %p101
      %p316 = pneg %p125
      %p317 = pneg %p122
      %p318 = pneg %p146
      %p319 = pneg %p143
      %p320 = pneg %p167
      %p321 = pneg %p164
      %p322 = pneg %p188
      %p323 = pneg %p185
      %p324 = pneg %p218
      %p325 = pneg %p215
      %s326 = smul.u32 %s22, 2
      %s327 = sadd.s32 %s326, %s23
      %p328 = scmp.lt.s32.totalorder %s327, 3
      %s329 = scalar_select %p328, %s327, 3
      %s330 = smul.addr %s329, 16
      %s331 = smul.addr %s330, 8
      %s332 = scalar_lea.vmem %s7, %s331
      %s333 = smul.u32 8, %s23
      %p334 = scmp.lt.s32.totalorder %s22, 1
      %s335 = scalar_select %p334, %s22, 1
      %p336 = scmp.lt.s32.totalorder %s333, 23
      %s337 = scalar_select %p336, %s333, 23
      %s338 = smul.addr %s337, 3
      %s339 = smul.addr %s335, 72
      %s340 = sadd.s32 %s338, %s339
      %s341 = smul.addr %s340, 8
      %s342 = scalar_lea.vmem %s0, %s341
      %s343 = smul.u32 8, %s23
      %s344 = sadd.s32 %s23, 1
      %s345 = smul.u32 8, %s344
      %p346 = scmp.lt.s32.totalorder %s22, 1
      %s347 = scalar_select %p346, %s22, 1
      %p348 = scmp.lt.s32.totalorder %s345, 23
      %s349 = scalar_select %p348, %s345, 23
      %s350 = smul.addr %s349, 3
      %s351 = smul.addr %s347, 72
      %s352 = sadd.s32 %s350, %s351
      %s353 = smul.addr %s352, 8
      %s354 = scalar_lea.vmem %s1, %s353
      %s355 = sadd.s32 %s23, 1
      %s356 = smul.u32 8, %s355
      %s357 = smul.u32 %s22, 2
      %s358 = sadd.s32 %s357, %s23
      %p359 = scmp.lt.s32.totalorder %s358, 3
      %s360 = scalar_select %p359, %s358, 3
      %s361 = smul.addr %s360, 16
      %s362 = smul.addr %s361, 8
      %s363 = scalar_lea.vmem %s7, %s362
      %s364 = smul.u32 %s22, 2
      %s365 = sadd.s32 %s364, %s23
      %v366 = vld [vmem:[%s3] sm:$0x1]
      %v367 = vld [vmem:[%s5] sm:$0x1]
      %v368 = vld [vmem:[%s6] sm:$0x1]
      %v369 = vld [vmem:[%s4] sm:$0xf]
      %v370 = vld [vmem:[%s342] sm:$0xff]
      %v371 = vld [vmem:[%s342 + $0x8] sm:$0xff]
      %v372 = vld [vmem:[%s342 + $0x18] sm:$0xff]
      %v373 = vld [vmem:[%s342 + $0x20] sm:$0xff]
      %v374 = vld [vmem:[%s342 + $0x30] sm:$0xff]
      %v375 = vld [vmem:[%s342 + $0x38] sm:$0xff]
      %v376 = vld [vmem:[%s342 + $0x48] sm:$0xff]
      %v377 = vld [vmem:[%s342 + $0x50] sm:$0xff]
      %v378 = vld [vmem:[%s342 + $0x60] sm:$0xff]
      %v379 = vld [vmem:[%s342 + $0x68] sm:$0xff]
      %v380 = vld [vmem:[%s342 + $0x78] sm:$0xff]
      %v381 = vld [vmem:[%s342 + $0x80] sm:$0xff]
      %v382 = vld [vmem:[%s2] sm:$0x1]
      %v383 = vlaneseq
      %v384 = vshrl.u32 %v383, 7
      %v385 = vsub.s32 0, %v384
      %v386 = vrot.slane %v382, %v385
      %v387 = vmul.f32 %v370, %v386
      %v388 = vmul.f32 %v371, %v386
      %v389 = vmul.f32 %v372, %v386
      %v390 = vmul.f32 %v373, %v386
      %v391 = vmul.f32 %v374, %v386
      %v392 = vmul.f32 %v375, %v386
      %v393 = vmul.f32 %v376, %v386
      %v394 = vmul.f32 %v377, %v386
      %v395 = vmul.f32 %v378, %v386
      %v396 = vmul.f32 %v379, %v386
      %v397 = vmul.f32 %v380, %v386
      %v398 = vmul.f32 %v381, %v386
      %v399 = vld [vmem:[%s342 + $0x1] sm:$0xff]
      %v400 = vld [vmem:[%s342 + $0x9] sm:$0xff]
      %v401 = vld [vmem:[%s342 + $0x19] sm:$0xff]
      %v402 = vld [vmem:[%s342 + $0x21] sm:$0xff]
      %v403 = vld [vmem:[%s342 + $0x31] sm:$0xff]
      %v404 = vld [vmem:[%s342 + $0x39] sm:$0xff]
      %v405 = vld [vmem:[%s342 + $0x49] sm:$0xff]
      %v406 = vld [vmem:[%s342 + $0x51] sm:$0xff]
      %v407 = vld [vmem:[%s342 + $0x61] sm:$0xff]
      %v408 = vld [vmem:[%s342 + $0x69] sm:$0xff]
      %v409 = vld [vmem:[%s342 + $0x79] sm:$0xff]
      %v410 = vld [vmem:[%s342 + $0x81] sm:$0xff]
      %v411 = vld [vmem:[%s2 + $0x1] sm:$0x1]
      %v412 = vlaneseq
      %v413 = vshrl.u32 %v412, 7
      %v414 = vsub.s32 0, %v413
      %v415 = vrot.slane %v411, %v414
      %v416 = vmul.f32 %v399, %v415
      %v417 = vmul.f32 %v400, %v415
      %v418 = vmul.f32 %v401, %v415
      %v419 = vmul.f32 %v402, %v415
      %v420 = vmul.f32 %v403, %v415
      %v421 = vmul.f32 %v404, %v415
      %v422 = vmul.f32 %v405, %v415
      %v423 = vmul.f32 %v406, %v415
      %v424 = vmul.f32 %v407, %v415
      %v425 = vmul.f32 %v408, %v415
      %v426 = vmul.f32 %v409, %v415
      %v427 = vmul.f32 %v410, %v415
      %v428 = vadd.f32 %v387, %v416
      %v429 = vadd.f32 %v388, %v417
      %v430 = vadd.f32 %v389, %v418
      %v431 = vadd.f32 %v390, %v419
      %v432 = vadd.f32 %v391, %v420
      %v433 = vadd.f32 %v392, %v421
      %v434 = vadd.f32 %v393, %v422
      %v435 = vadd.f32 %v394, %v423
      %v436 = vadd.f32 %v395, %v424
      %v437 = vadd.f32 %v396, %v425
      %v438 = vadd.f32 %v397, %v426
      %v439 = vadd.f32 %v398, %v427
      %v440 = vld [vmem:[%s342 + $0x2] sm:$0xff]
      %v441 = vld [vmem:[%s342 + $0xa] sm:$0xff]
      %v442 = vld [vmem:[%s342 + $0x1a] sm:$0xff]
      %v443 = vld [vmem:[%s342 + $0x22] sm:$0xff]
      %v444 = vld [vmem:[%s342 + $0x32] sm:$0xff]
      %v445 = vld [vmem:[%s342 + $0x3a] sm:$0xff]
      %v446 = vld [vmem:[%s342 + $0x4a] sm:$0xff]
      %v447 = vld [vmem:[%s342 + $0x52] sm:$0xff]
      %v448 = vld [vmem:[%s342 + $0x62] sm:$0xff]
      %v449 = vld [vmem:[%s342 + $0x6a] sm:$0xff]
      %v450 = vld [vmem:[%s342 + $0x7a] sm:$0xff]
      %v451 = vld [vmem:[%s342 + $0x82] sm:$0xff]
      %v452 = vld [vmem:[%s2 + $0x2] sm:$0x1]
      %v453 = vlaneseq
      %v454 = vshrl.u32 %v453, 7
      %v455 = vsub.s32 0, %v454
      %v456 = vrot.slane %v452, %v455
      %v457 = vmul.f32 %v440, %v456
      %v458 = vmul.f32 %v441, %v456
      %v459 = vmul.f32 %v442, %v456
      %v460 = vmul.f32 %v443, %v456
      %v461 = vmul.f32 %v444, %v456
      %v462 = vmul.f32 %v445, %v456
      %v463 = vmul.f32 %v446, %v456
      %v464 = vmul.f32 %v447, %v456
      %v465 = vmul.f32 %v448, %v456
      %v466 = vmul.f32 %v449, %v456
      %v467 = vmul.f32 %v450, %v456
      %v468 = vmul.f32 %v451, %v456
      %v469 = vadd.f32 %v428, %v457
      %v470 = vadd.f32 %v429, %v458
      %v471 = vadd.f32 %v430, %v459
      %v472 = vadd.f32 %v431, %v460
      %v473 = vadd.f32 %v432, %v461
      %v474 = vadd.f32 %v433, %v462
      %v475 = vadd.f32 %v434, %v463
      %v476 = vadd.f32 %v435, %v464
      %v477 = vadd.f32 %v436, %v465
      %v478 = vadd.f32 %v437, %v466
      %v479 = vadd.f32 %v438, %v467
      %v480 = vadd.f32 %v439, %v468
      %s481 = scalar_lea.vmem %s342, 24
      %v482 = vld [vmem:[%s481] sm:$0xff]
      %v483 = vld [vmem:[%s481 + $0x8] sm:$0xff]
      %v484 = vld [vmem:[%s481 + $0x18] sm:$0xff]
      %v485 = vld [vmem:[%s481 + $0x20] sm:$0xff]
      %v486 = vld [vmem:[%s481 + $0x30] sm:$0xff]
      %v487 = vld [vmem:[%s481 + $0x38] sm:$0xff]
      %v488 = vld [vmem:[%s481 + $0x48] sm:$0xff]
      %v489 = vld [vmem:[%s481 + $0x50] sm:$0xff]
      %v490 = vld [vmem:[%s481 + $0x60] sm:$0xff]
      %v491 = vld [vmem:[%s481 + $0x68] sm:$0xff]
      %v492 = vld [vmem:[%s481 + $0x78] sm:$0xff]
      %v493 = vld [vmem:[%s481 + $0x80] sm:$0xff]
      %v494 = vld [vmem:[%s2 + $0x3] sm:$0x1]
      %v495 = vlaneseq
      %v496 = vshrl.u32 %v495, 7
      %v497 = vsub.s32 0, %v496
      %v498 = vrot.slane %v494, %v497
      %v499 = vmul.f32 %v482, %v498
      %v500 = vmul.f32 %v483, %v498
      %v501 = vmul.f32 %v484, %v498
      %v502 = vmul.f32 %v485, %v498
      %v503 = vmul.f32 %v486, %v498
      %v504 = vmul.f32 %v487, %v498
      %v505 = vmul.f32 %v488, %v498
      %v506 = vmul.f32 %v489, %v498
      %v507 = vmul.f32 %v490, %v498
      %v508 = vmul.f32 %v491, %v498
      %v509 = vmul.f32 %v492, %v498
      %v510 = vmul.f32 %v493, %v498
      %v511 = vadd.f32 %v469, %v499
      %v512 = vadd.f32 %v470, %v500
      %v513 = vadd.f32 %v471, %v501
      %v514 = vadd.f32 %v472, %v502
      %v515 = vadd.f32 %v473, %v503
      %v516 = vadd.f32 %v474, %v504
      %v517 = vadd.f32 %v475, %v505
      %v518 = vadd.f32 %v476, %v506
      %v519 = vadd.f32 %v477, %v507
      %v520 = vadd.f32 %v478, %v508
      %v521 = vadd.f32 %v479, %v509
      %v522 = vadd.f32 %v480, %v510
      %v523 = vld [vmem:[%s481 + $0x1] sm:$0xff]
      %v524 = vld [vmem:[%s481 + $0x9] sm:$0xff]
      %v525 = vld [vmem:[%s481 + $0x19] sm:$0xff]
      %v526 = vld [vmem:[%s481 + $0x21] sm:$0xff]
      %v527 = vld [vmem:[%s481 + $0x31] sm:$0xff]
      %v528 = vld [vmem:[%s481 + $0x39] sm:$0xff]
      %v529 = vld [vmem:[%s481 + $0x49] sm:$0xff]
      %v530 = vld [vmem:[%s481 + $0x51] sm:$0xff]
      %v531 = vld [vmem:[%s481 + $0x61] sm:$0xff]
      %v532 = vld [vmem:[%s481 + $0x69] sm:$0xff]
      %v533 = vld [vmem:[%s481 + $0x79] sm:$0xff]
      %v534 = vld [vmem:[%s481 + $0x81] sm:$0xff]
      %v535 = vld [vmem:[%s2 + $0x4] sm:$0x1]
      %v536 = vlaneseq
      %v537 = vshrl.u32 %v536, 7
      %v538 = vsub.s32 0, %v537
      %v539 = vrot.slane %v535, %v538
      %v540 = vmul.f32 %v523, %v539
      %v541 = vmul.f32 %v524, %v539
      %v542 = vmul.f32 %v525, %v539
      %v543 = vmul.f32 %v526, %v539
      %v544 = vmul.f32 %v527, %v539
      %v545 = vmul.f32 %v528, %v539
      %v546 = vmul.f32 %v529, %v539
      %v547 = vmul.f32 %v530, %v539
      %v548 = vmul.f32 %v531, %v539
      %v549 = vmul.f32 %v532, %v539
      %v550 = vmul.f32 %v533, %v539
      %v551 = vmul.f32 %v534, %v539
      %v552 = vadd.f32 %v511, %v540
      %v553 = vadd.f32 %v512, %v541
      %v554 = vadd.f32 %v513, %v542
      %v555 = vadd.f32 %v514, %v543
      %v556 = vadd.f32 %v515, %v544
      %v557 = vadd.f32 %v516, %v545
      %v558 = vadd.f32 %v517, %v546
      %v559 = vadd.f32 %v518, %v547
      %v560 = vadd.f32 %v519, %v548
      %v561 = vadd.f32 %v520, %v549
      %v562 = vadd.f32 %v521, %v550
      %v563 = vadd.f32 %v522, %v551
      %v564 = vld [vmem:[%s481 + $0x2] sm:$0xff]
      %v565 = vld [vmem:[%s481 + $0xa] sm:$0xff]
      %v566 = vld [vmem:[%s481 + $0x1a] sm:$0xff]
      %v567 = vld [vmem:[%s481 + $0x22] sm:$0xff]
      %v568 = vld [vmem:[%s481 + $0x32] sm:$0xff]
      %v569 = vld [vmem:[%s481 + $0x3a] sm:$0xff]
      %v570 = vld [vmem:[%s481 + $0x4a] sm:$0xff]
      %v571 = vld [vmem:[%s481 + $0x52] sm:$0xff]
      %v572 = vld [vmem:[%s481 + $0x62] sm:$0xff]
      %v573 = vld [vmem:[%s481 + $0x6a] sm:$0xff]
      %v574 = vld [vmem:[%s481 + $0x7a] sm:$0xff]
      %v575 = vld [vmem:[%s481 + $0x82] sm:$0xff]
      %v576 = vld [vmem:[%s2 + $0x5] sm:$0x1]
      %v577 = vlaneseq
      %v578 = vshrl.u32 %v577, 7
      %v579 = vsub.s32 0, %v578
      %v580 = vrot.slane %v576, %v579
      %v581 = vmul.f32 %v564, %v580
      %v582 = vmul.f32 %v565, %v580
      %v583 = vmul.f32 %v566, %v580
      %v584 = vmul.f32 %v567, %v580
      %v585 = vmul.f32 %v568, %v580
      %v586 = vmul.f32 %v569, %v580
      %v587 = vmul.f32 %v570, %v580
      %v588 = vmul.f32 %v571, %v580
      %v589 = vmul.f32 %v572, %v580
      %v590 = vmul.f32 %v573, %v580
      %v591 = vmul.f32 %v574, %v580
      %v592 = vmul.f32 %v575, %v580
      %v593 = vadd.f32 %v552, %v581
      %v594 = vadd.f32 %v553, %v582
      %v595 = vadd.f32 %v554, %v583
      %v596 = vadd.f32 %v555, %v584
      %v597 = vadd.f32 %v556, %v585
      %v598 = vadd.f32 %v557, %v586
      %v599 = vadd.f32 %v558, %v587
      %v600 = vadd.f32 %v559, %v588
      %v601 = vadd.f32 %v560, %v589
      %v602 = vadd.f32 %v561, %v590
      %v603 = vadd.f32 %v562, %v591
      %v604 = vadd.f32 %v563, %v592
      %s605 = scalar_lea.vmem %s342, 48
      %v606 = vld [vmem:[%s605] sm:$0xff]
      %v607 = vld [vmem:[%s605 + $0x8] sm:$0xff]
      %v608 = vld [vmem:[%s605 + $0x18] sm:$0xff]
      %v609 = vld [vmem:[%s605 + $0x20] sm:$0xff]
      %v610 = vld [vmem:[%s605 + $0x30] sm:$0xff]
      %v611 = vld [vmem:[%s605 + $0x38] sm:$0xff]
      %v612 = vld [vmem:[%s605 + $0x48] sm:$0xff]
      %v613 = vld [vmem:[%s605 + $0x50] sm:$0xff]
      %v614 = vld [vmem:[%s605 + $0x60] sm:$0xff]
      %v615 = vld [vmem:[%s605 + $0x68] sm:$0xff]
      %v616 = vld [vmem:[%s605 + $0x78] sm:$0xff]
      %v617 = vld [vmem:[%s605 + $0x80] sm:$0xff]
      %v618 = vld [vmem:[%s2 + $0x6] sm:$0x1]
      %v619 = vlaneseq
      %v620 = vshrl.u32 %v619, 7
      %v621 = vsub.s32 0, %v620
      %v622 = vrot.slane %v618, %v621
      %v623 = vmul.f32 %v606, %v622
      %v624 = vmul.f32 %v607, %v622
      %v625 = vmul.f32 %v608, %v622
      %v626 = vmul.f32 %v609, %v622
      %v627 = vmul.f32 %v610, %v622
      %v628 = vmul.f32 %v611, %v622
      %v629 = vmul.f32 %v612, %v622
      %v630 = vmul.f32 %v613, %v622
      %v631 = vmul.f32 %v614, %v622
      %v632 = vmul.f32 %v615, %v622
      %v633 = vmul.f32 %v616, %v622
      %v634 = vmul.f32 %v617, %v622
      %v635 = vadd.f32 %v593, %v623
      %v636 = vadd.f32 %v594, %v624
      %v637 = vadd.f32 %v595, %v625
      %v638 = vadd.f32 %v596, %v626
      %v639 = vadd.f32 %v597, %v627
      %v640 = vadd.f32 %v598, %v628
      %v641 = vadd.f32 %v599, %v629
      %v642 = vadd.f32 %v600, %v630
      %v643 = vadd.f32 %v601, %v631
      %v644 = vadd.f32 %v602, %v632
      %v645 = vadd.f32 %v603, %v633
      %v646 = vadd.f32 %v604, %v634
      %v647 = vld [vmem:[%s605 + $0x1] sm:$0xff]
      %v648 = vld [vmem:[%s605 + $0x9] sm:$0xff]
      %v649 = vld [vmem:[%s605 + $0x19] sm:$0xff]
      %v650 = vld [vmem:[%s605 + $0x21] sm:$0xff]
      %v651 = vld [vmem:[%s605 + $0x31] sm:$0xff]
      %v652 = vld [vmem:[%s605 + $0x39] sm:$0xff]
      %v653 = vld [vmem:[%s605 + $0x49] sm:$0xff]
      %v654 = vld [vmem:[%s605 + $0x51] sm:$0xff]
      %v655 = vld [vmem:[%s605 + $0x61] sm:$0xff]
      %v656 = vld [vmem:[%s605 + $0x69] sm:$0xff]
      %v657 = vld [vmem:[%s605 + $0x79] sm:$0xff]
      %v658 = vld [vmem:[%s605 + $0x81] sm:$0xff]
      %v659 = vld [vmem:[%s2 + $0x7] sm:$0x1]
      %v660 = vlaneseq
      %v661 = vshrl.u32 %v660, 7
      %v662 = vsub.s32 0, %v661
      %v663 = vrot.slane %v659, %v662
      %v664 = vmul.f32 %v647, %v663
      %v665 = vmul.f32 %v648, %v663
      %v666 = vmul.f32 %v649, %v663
      %v667 = vmul.f32 %v650, %v663
      %v668 = vmul.f32 %v651, %v663
      %v669 = vmul.f32 %v652, %v663
      %v670 = vmul.f32 %v653, %v663
      %v671 = vmul.f32 %v654, %v663
      %v672 = vmul.f32 %v655, %v663
      %v673 = vmul.f32 %v656, %v663
      %v674 = vmul.f32 %v657, %v663
      %v675 = vmul.f32 %v658, %v663
      %v676 = vadd.f32 %v635, %v664
      %v677 = vadd.f32 %v636, %v665
      %v678 = vadd.f32 %v637, %v666
      %v679 = vadd.f32 %v638, %v667
      %v680 = vadd.f32 %v639, %v668
      %v681 = vadd.f32 %v640, %v669
      %v682 = vadd.f32 %v641, %v670
      %v683 = vadd.f32 %v642, %v671
      %v684 = vadd.f32 %v643, %v672
      %v685 = vadd.f32 %v644, %v673
      %v686 = vadd.f32 %v645, %v674
      %v687 = vadd.f32 %v646, %v675
      %v688 = vld [vmem:[%s605 + $0x2] sm:$0xff]
      %v689 = vld [vmem:[%s605 + $0xa] sm:$0xff]
      %v690 = vld [vmem:[%s605 + $0x1a] sm:$0xff]
      %v691 = vld [vmem:[%s605 + $0x22] sm:$0xff]
      %v692 = vld [vmem:[%s605 + $0x32] sm:$0xff]
      %v693 = vld [vmem:[%s605 + $0x3a] sm:$0xff]
      %v694 = vld [vmem:[%s605 + $0x4a] sm:$0xff]
      %v695 = vld [vmem:[%s605 + $0x52] sm:$0xff]
      %v696 = vld [vmem:[%s605 + $0x62] sm:$0xff]
      %v697 = vld [vmem:[%s605 + $0x6a] sm:$0xff]
      %v698 = vld [vmem:[%s605 + $0x7a] sm:$0xff]
      %v699 = vld [vmem:[%s605 + $0x82] sm:$0xff]
      %v700 = vld [vmem:[%s2 + $0x8] sm:$0x1]
      %v701 = vlaneseq
      %v702 = vshrl.u32 %v701, 7
      %v703 = vsub.s32 0, %v702
      %v704 = vrot.slane %v700, %v703
      %v705 = vmul.f32 %v688, %v704
      %v706 = vmul.f32 %v689, %v704
      %v707 = vmul.f32 %v690, %v704
      %v708 = vmul.f32 %v691, %v704
      %v709 = vmul.f32 %v692, %v704
      %v710 = vmul.f32 %v693, %v704
      %v711 = vmul.f32 %v694, %v704
      %v712 = vmul.f32 %v695, %v704
      %v713 = vmul.f32 %v696, %v704
      %v714 = vmul.f32 %v697, %v704
      %v715 = vmul.f32 %v698, %v704
      %v716 = vmul.f32 %v699, %v704
      %v717 = vadd.f32 %v676, %v705
      %v718 = vadd.f32 %v677, %v706
      %v719 = vadd.f32 %v678, %v707
      %v720 = vadd.f32 %v679, %v708
      %v721 = vadd.f32 %v680, %v709
      %v722 = vadd.f32 %v681, %v710
      %v723 = vadd.f32 %v682, %v711
      %v724 = vadd.f32 %v683, %v712
      %v725 = vadd.f32 %v684, %v713
      %v726 = vadd.f32 %v685, %v714
      %v727 = vadd.f32 %v686, %v715
      %v728 = vadd.f32 %v687, %v716
      %v730 = vlaneseq
      %v731 = vshrl.u32 %v730, 7
      %v732 = vsub.s32 0, %v731
      %v733 = vrot.slane %v366, %v732
      %v735 = vadd.f32 %v717, %v733
      %v736 = vadd.f32 %v718, %v733
      %v737 = vadd.f32 %v719, %v733
      %v738 = vadd.f32 %v720, %v733
      %v739 = vadd.f32 %v721, %v733
      %v740 = vadd.f32 %v722, %v733
      %v741 = vadd.f32 %v723, %v733
      %v742 = vadd.f32 %v724, %v733
      %v743 = vadd.f32 %v725, %v733
      %v744 = vadd.f32 %v726, %v733
      %v745 = vadd.f32 %v727, %v733
      %v746 = vadd.f32 %v728, %v733
      %v747 = vmax.f32 %v735, 0.0
      %v748 = vmax.f32 %v736, 0.0
      %v749 = vmax.f32 %v737, 0.0
      %v750 = vmax.f32 %v738, 0.0
      %v751 = vmax.f32 %v739, 0.0
      %v752 = vmax.f32 %v740, 0.0
      %v753 = vmax.f32 %v741, 0.0
      %v754 = vmax.f32 %v742, 0.0
      %v755 = vmax.f32 %v743, 0.0
      %v756 = vmax.f32 %v744, 0.0
      %v757 = vmax.f32 %v745, 0.0
      %v758 = vmax.f32 %v746, 0.0
      %vm759 = vcmask 31744
      %v761 = vsel %vm759, %v747, 0
      %v764 = vsel %vm759, %v748, 0
      %v767 = vsel %vm759, %v749, 0
      %v770 = vsel %vm759, %v750, 0
      %v773 = vsel %vm759, %v751, 0
      %v776 = vsel %vm759, %v752, 0
      %v779 = vsel %vm759, %v753, 0
      %v782 = vsel %vm759, %v754, 0
      %v785 = vsel %vm759, %v755, 0
      %v788 = vsel %vm759, %v756, 0
      %v791 = vsel %vm759, %v757, 0
      %v794 = vsel %vm759, %v758, 0
      %vm796 = vcmask 1043456
      %v798 = vsel %vm796, %v369, 0
      %800 = vmatprep.subr.mxu0 0.0
      %801 = vmatpush1.msra.mxu0 %v798
      %802 = vmatprep.subr.mxu0 0.0
      %803 = vmatpush1.msra.mxu0 0.0
      %804 = vmatprep.subr.mxu0 0.0
      %805 = vmatpush1.msra.mxu0 0.0
      %806 = vmatprep.subr.mxu0 0.0
      %807 = vmatpush1.msra.mxu0 0.0
      %808 = vmatprep.subr.mxu0 0.0
      %809 = vmatpush1.msra.mxu0 0.0
      %810 = vmatprep.subr.mxu0 0.0
      %811 = vmatpush1.msra.mxu0 0.0
      %812 = vmatprep.subr.mxu0 0.0
      %813 = vmatpush1.msra.mxu0 0.0
      %814 = vmatprep.subr.mxu0 0.0
      %815 = vmatpush1.msra.mxu0 0.0
      %816 = vmatprep.subr.mxu0 0.0
      %817 = vmatpush1.msra.mxu0 0.0
      %818 = vmatprep.subr.mxu0 0.0
      %819 = vmatpush1.msra.mxu0 0.0
      %820 = vmatprep.subr.mxu0 0.0
      %821 = vmatpush1.msra.mxu0 0.0
      %822 = vmatprep.subr.mxu0 0.0
      %823 = vmatpush1.msra.mxu0 0.0
      %824 = vmatprep.subr.mxu0 0.0
      %825 = vmatpush1.msra.mxu0 0.0
      %826 = vmatprep.subr.mxu0 0.0
      %827 = vmatpush1.msra.mxu0 0.0
      %828 = vmatprep.subr.mxu0 0.0
      %829 = vmatpush1.msra.mxu0 0.0
      %830 = vmatprep.subr.mxu0 0.0
      %831 = vmatpush1.msra.mxu0 0.0
      %832 = vmatprep.subr.mxu0 0.0
      %833 = vmatpush1.msra.mxu0 0.0
      %834 = vmatprep.subr.mxu0 0.0
      %835 = vmatpush1.msra.mxu0 0.0
      %836 = vmatprep.subr.mxu0 0.0
      %837 = vmatpush1.msra.mxu0 0.0
      %838 = vmatprep.subr.mxu0 0.0
      %839 = vmatpush1.msra.mxu0 0.0
      %840 = vmatprep.subr.mxu0 0.0
      %841 = vmatpush1.msra.mxu0 0.0
      %842 = vmatprep.subr.mxu0 0.0
      %843 = vmatpush1.msra.mxu0 0.0
      %844 = vmatprep.subr.mxu0 0.0
      %845 = vmatpush1.msra.mxu0 0.0
      %846 = vmatprep.subr.mxu0 0.0
      %847 = vmatpush1.msra.mxu0 0.0
      %848 = vmatprep.subr.mxu0 0.0
      %849 = vmatpush1.msra.mxu0 0.0
      %850 = vmatprep.subr.mxu0 0.0
      %851 = vmatpush1.msra.mxu0 0.0
      %852 = vmatprep.subr.mxu0 0.0
      %853 = vmatpush1.msra.mxu0 0.0
      %854 = vmatprep.subr.mxu0 0.0
      %855 = vmatpush1.msra.mxu0 0.0
      %856 = vmatprep.subr.mxu0 0.0
      %857 = vmatpush1.msra.mxu0 0.0
      %858 = vmatprep.subr.mxu0 0.0
      %859 = vmatpush1.msra.mxu0 0.0
      %860 = vmatprep.subr.mxu0 0.0
      %861 = vmatpush1.msra.mxu0 0.0
      %862 = vmatprep.subr.mxu0 0.0
      %863 = vmatpush1.msra.mxu0 0.0
      %864 = vmatprep.mubr.f32.mxu0 0.0
      %865 = vmatmul.mubr.f32.gmra.mrb[0].mxu0 %v761
      %v866 = vpop.f32.mrb[0].mxu0
      %v867 = vadd.f32 0.0, %v866
      %v868 = vpop.f32.mrb[0].mxu0
      %869 = vmatprep.mubr.f32.mxu0 0.0
      %870 = vmatmul.mubr.f32.gmra.mrb[0].mxu0 %v764
      %v871 = vpop.f32.mrb[0].mxu0
      %v872 = vadd.f32 0.0, %v871
      %v873 = vpop.f32.mrb[0].mxu0
      %874 = vmatprep.mubr.f32.mxu0 0.0
      %875 = vmatmul.mubr.f32.gmra.mrb[0].mxu0 %v767
      %v876 = vpop.f32.mrb[0].mxu0
      %v877 = vadd.f32 0.0, %v876
      %v878 = vpop.f32.mrb[0].mxu0
      %879 = vmatprep.mubr.f32.mxu0 0.0
      %880 = vmatmul.mubr.f32.gmra.mrb[0].mxu0 %v770
      %v881 = vpop.f32.mrb[0].mxu0
      %v882 = vadd.f32 0.0, %v881
      %v883 = vpop.f32.mrb[0].mxu0
      %884 = vmatprep.mubr.f32.mxu0 0.0
      %885 = vmatmul.mubr.f32.gmra.mrb[0].mxu0 %v773
      %v886 = vpop.f32.mrb[0].mxu0
      %v887 = vadd.f32 0.0, %v886
      %v888 = vpop.f32.mrb[0].mxu0
      %889 = vmatprep.mubr.f32.mxu0 0.0
      %890 = vmatmul.mubr.f32.gmra.mrb[0].mxu0 %v776
      %v891 = vpop.f32.mrb[0].mxu0
      %v892 = vadd.f32 0.0, %v891
      %v893 = vpop.f32.mrb[0].mxu0
      %894 = vmatprep.mubr.f32.mxu0 0.0
      %895 = vmatmul.mubr.f32.gmra.mrb[0].mxu0 %v779
      %v896 = vpop.f32.mrb[0].mxu0
      %v897 = vadd.f32 0.0, %v896
      %v898 = vpop.f32.mrb[0].mxu0
      %899 = vmatprep.mubr.f32.mxu0 0.0
      %900 = vmatmul.mubr.f32.gmra.mrb[0].mxu0 %v782
      %v901 = vpop.f32.mrb[0].mxu0
      %v902 = vadd.f32 0.0, %v901
      %v903 = vpop.f32.mrb[0].mxu0
      %904 = vmatprep.mubr.f32.mxu0 0.0
      %905 = vmatmul.mubr.f32.gmra.mrb[0].mxu0 %v785
      %v906 = vpop.f32.mrb[0].mxu0
      %v907 = vadd.f32 0.0, %v906
      %v908 = vpop.f32.mrb[0].mxu0
      %909 = vmatprep.mubr.f32.mxu0 0.0
      %910 = vmatmul.mubr.f32.gmra.mrb[0].mxu0 %v788
      %v911 = vpop.f32.mrb[0].mxu0
      %v912 = vadd.f32 0.0, %v911
      %v913 = vpop.f32.mrb[0].mxu0
      %914 = vmatprep.mubr.f32.mxu0 0.0
      %915 = vmatmul.mubr.f32.gmra.mrb[0].mxu0 %v791
      %v916 = vpop.f32.mrb[0].mxu0
      %v917 = vadd.f32 0.0, %v916
      %v918 = vpop.f32.mrb[0].mxu0
      %919 = vmatprep.mubr.f32.mxu0 0.0
      %920 = vmatmul.mubr.f32.gmra.mrb[0].mxu0 %v794
      %v921 = vpop.f32.mrb[0].mxu0
      %v922 = vadd.f32 0.0, %v921
      %v923 = vpop.f32.mrb[0].mxu0
      %924 = vdwg.mxu0
      %v926 = vlaneseq
      %v927 = vshrl.u32 %v926, 7
      %v928 = vsub.s32 0, %v927
      %v929 = vrot.slane %v367, %v928
      %v931 = vmul.f32 %v867, %v929
      %v932 = vmul.f32 %v872, %v929
      %v933 = vmul.f32 %v877, %v929
      %v934 = vmul.f32 %v882, %v929
      %v935 = vmul.f32 %v887, %v929
      %v936 = vmul.f32 %v892, %v929
      %v937 = vmul.f32 %v897, %v929
      %v938 = vmul.f32 %v902, %v929
      %v939 = vmul.f32 %v907, %v929
      %v940 = vmul.f32 %v912, %v929
      %v941 = vmul.f32 %v917, %v929
      %v942 = vmul.f32 %v922, %v929
      %v944 = vlaneseq
      %v945 = vshrl.u32 %v944, 7
      %v946 = vsub.s32 0, %v945
      %v947 = vrot.slane %v368, %v946
      %v949 = vadd.f32 %v931, %v947
      %v950 = vadd.f32 %v932, %v947
      %v951 = vadd.f32 %v933, %v947
      %v952 = vadd.f32 %v934, %v947
      %v953 = vadd.f32 %v935, %v947
      %v954 = vadd.f32 %v936, %v947
      %v955 = vadd.f32 %v937, %v947
      %v956 = vadd.f32 %v938, %v947
      %v957 = vadd.f32 %v939, %v947
      %v958 = vadd.f32 %v940, %v947
      %v959 = vadd.f32 %v941, %v947
      %v960 = vadd.f32 %v942, %v947
      %v961 = vmax.f32 %v949, 0.0
      %v962 = vmax.f32 %v950, 0.0
      %v963 = vmax.f32 %v951, 0.0
      %v964 = vmax.f32 %v952, 0.0
      %v965 = vmax.f32 %v953, 0.0
      %v966 = vmax.f32 %v954, 0.0
      %v967 = vmax.f32 %v955, 0.0
      %v968 = vmax.f32 %v956, 0.0
      %v969 = vmax.f32 %v957, 0.0
      %v970 = vmax.f32 %v958, 0.0
      %v971 = vmax.f32 %v959, 0.0
      %v972 = vmax.f32 %v960, 0.0
      %vm973 = vcmask 64512
      %974 = vst.msk [vmem:[%s363] sm:$0xff] %vm973, %v961
      %975 = vst.msk [vmem:[%s363 + $0x8] sm:$0xff] %vm973, %v962
      %976 = vst.msk [vmem:[%s363 + $0x10] sm:$0xff] %vm973, %v963
      %977 = vst.msk [vmem:[%s363 + $0x18] sm:$0xff] %vm973, %v964
      %978 = vst.msk [vmem:[%s363 + $0x20] sm:$0xff] %vm973, %v965
      %979 = vst.msk [vmem:[%s363 + $0x28] sm:$0xff] %vm973, %v966
      %980 = vst.msk [vmem:[%s363 + $0x30] sm:$0xff] %vm973, %v967
      %981 = vst.msk [vmem:[%s363 + $0x38] sm:$0xff] %vm973, %v968
      %982 = vst.msk [vmem:[%s363 + $0x40] sm:$0xff] %vm973, %v969
      %983 = vst.msk [vmem:[%s363 + $0x48] sm:$0xff] %vm973, %v970
      %984 = vst.msk [vmem:[%s363 + $0x50] sm:$0xff] %vm973, %v971
      %985 = vst.msk [vmem:[%s363 + $0x58] sm:$0xff] %vm973, %v972
      %s986 = scalar_lea.vmem %s342, 144
      %v987 = vld [vmem:[%s986] sm:$0xff]
      %v988 = vld [vmem:[%s986 + $0x8] sm:$0xff]
      %v989 = vld [vmem:[%s986 + $0x10] sm:$0x3]
      %v990 = vld [vmem:[%s986 + $0x18] sm:$0xff]
      %v991 = vld [vmem:[%s986 + $0x20] sm:$0xff]
      %v992 = vld [vmem:[%s986 + $0x28] sm:$0x3]
      %993 = vst.msk [vmem:[#allocation2] sm:$0xff] %vm759, %v987
      %994 = vst.msk [vmem:[#allocation2 + $0x8] sm:$0xff] %vm759, %v988
      %vm995 = vcmask 25600
      %996 = vst.msk [vmem:[#allocation2 + $0x10] sm:$0x3] %vm995, %v989
      %997 = vst.msk [vmem:[#allocation2 + $0x18] sm:$0xff] %vm759, %v990
      %998 = vst.msk [vmem:[#allocation2 + $0x20] sm:$0xff] %vm759, %v991
      %999 = vst.msk [vmem:[#allocation2 + $0x28] sm:$0x3] %vm995, %v992
      %v1000 = vld [vmem:[%s354] sm:$0xff]
      %v1001 = vld [vmem:[%s354 + $0x8] sm:$0xff]
      %v1002 = vld [vmem:[%s354 + $0x10] sm:$0x3]
      %v1003 = vld [vmem:[%s354 + $0x18] sm:$0xff]
      %v1004 = vld [vmem:[%s354 + $0x20] sm:$0xff]
      %v1005 = vld [vmem:[%s354 + $0x28] sm:$0x3]
      %s1006 = scalar_lea.vmem [#allocation2], 48
      %1007 = vst.msk [vmem:[%s1006] sm:$0xff] %vm759, %v1000
      %1008 = vst.msk [vmem:[%s1006 + $0x8] sm:$0xff] %vm759, %v1001
      %1009 = vst.msk [vmem:[%s1006 + $0x10] sm:$0x3] %vm995, %v1002
      %1010 = vst.msk [vmem:[%s1006 + $0x18] sm:$0xff] %vm759, %v1003
      %1011 = vst.msk [vmem:[%s1006 + $0x20] sm:$0xff] %vm759, %v1004
      %1012 = vst.msk [vmem:[%s1006 + $0x28] sm:$0x3] %vm995, %v1005
      %v1013 = vld [vmem:[#allocation2] sm:$0xff]
      %v1014 = vld [vmem:[#allocation2 + $0x8] sm:$0xff]
      %v1015 = vld [vmem:[#allocation2 + $0x18] sm:$0xff]
      %v1016 = vld [vmem:[#allocation2 + $0x20] sm:$0xff]
      %v1017 = vld [vmem:[%s2] sm:$0x1]
      %v1018 = vlaneseq
      %v1019 = vshrl.u32 %v1018, 7
      %v1020 = vsub.s32 0, %v1019
      %v1021 = vrot.slane %v1017, %v1020
      %v1022 = vmul.f32 %v1013, %v1021
      %v1023 = vmul.f32 %v1014, %v1021
      %v1024 = vmul.f32 %v1015, %v1021
      %v1025 = vmul.f32 %v1016, %v1021
      %v1026 = vld [vmem:[#allocation2 + $0x1] sm:$0xff]
      %v1027 = vld [vmem:[#allocation2 + $0x9] sm:$0xff]
      %v1028 = vld [vmem:[#allocation2 + $0x19] sm:$0xff]
      %v1029 = vld [vmem:[#allocation2 + $0x21] sm:$0xff]
      %v1030 = vld [vmem:[%s2 + $0x1] sm:$0x1]
      %v1031 = vlaneseq
      %v1032 = vshrl.u32 %v1031, 7
      %v1033 = vsub.s32 0, %v1032
      %v1034 = vrot.slane %v1030, %v1033
      %v1035 = vmul.f32 %v1026, %v1034
      %v1036 = vmul.f32 %v1027, %v1034
      %v1037 = vmul.f32 %v1028, %v1034
      %v1038 = vmul.f32 %v1029, %v1034
      %v1039 = vadd.f32 %v1022, %v1035
      %v1040 = vadd.f32 %v1023, %v1036
      %v1041 = vadd.f32 %v1024, %v1037
      %v1042 = vadd.f32 %v1025, %v1038
      %v1043 = vld [vmem:[#allocation2 + $0x2] sm:$0xff]
      %v1044 = vld [vmem:[#allocation2 + $0xa] sm:$0xff]
      %v1045 = vld [vmem:[#allocation2 + $0x1a] sm:$0xff]
      %v1046 = vld [vmem:[#allocation2 + $0x22] sm:$0xff]
      %v1047 = vld [vmem:[%s2 + $0x2] sm:$0x1]
      %v1048 = vlaneseq
      %v1049 = vshrl.u32 %v1048, 7
      %v1050 = vsub.s32 0, %v1049
      %v1051 = vrot.slane %v1047, %v1050
      %v1052 = vmul.f32 %v1043, %v1051
      %v1053 = vmul.f32 %v1044, %v1051
      %v1054 = vmul.f32 %v1045, %v1051
      %v1055 = vmul.f32 %v1046, %v1051
      %v1056 = vadd.f32 %v1039, %v1052
      %v1057 = vadd.f32 %v1040, %v1053
      %v1058 = vadd.f32 %v1041, %v1054
      %v1059 = vadd.f32 %v1042, %v1055
      %s1060 = scalar_lea.vmem [#allocation2], 24
      %v1061 = vld [vmem:[%s1060] sm:$0xff]
      %v1062 = vld [vmem:[%s1060 + $0x8] sm:$0xff]
      %v1063 = vld [vmem:[%s1060 + $0x18] sm:$0xff]
      %v1064 = vld [vmem:[%s1060 + $0x20] sm:$0xff]
      %v1065 = vld [vmem:[%s2 + $0x3] sm:$0x1]
      %v1066 = vlaneseq
      %v1067 = vshrl.u32 %v1066, 7
      %v1068 = vsub.s32 0, %v1067
      %v1069 = vrot.slane %v1065, %v1068
      %v1070 = vmul.f32 %v1061, %v1069
      %v1071 = vmul.f32 %v1062, %v1069
      %v1072 = vmul.f32 %v1063, %v1069
      %v1073 = vmul.f32 %v1064, %v1069
      %v1074 = vadd.f32 %v1056, %v1070
      %v1075 = vadd.f32 %v1057, %v1071
      %v1076 = vadd.f32 %v1058, %v1072
      %v1077 = vadd.f32 %v1059, %v1073
      %v1078 = vld [vmem:[%s1060 + $0x1] sm:$0xff]
      %v1079 = vld [vmem:[%s1060 + $0x9] sm:$0xff]
      %v1080 = vld [vmem:[%s1060 + $0x19] sm:$0xff]
      %v1081 = vld [vmem:[%s1060 + $0x21] sm:$0xff]
      %v1082 = vld [vmem:[%s2 + $0x4] sm:$0x1]
      %v1083 = vlaneseq
      %v1084 = vshrl.u32 %v1083, 7
      %v1085 = vsub.s32 0, %v1084
      %v1086 = vrot.slane %v1082, %v1085
      %v1087 = vmul.f32 %v1078, %v1086
      %v1088 = vmul.f32 %v1079, %v1086
      %v1089 = vmul.f32 %v1080, %v1086
      %v1090 = vmul.f32 %v1081, %v1086
      %v1091 = vadd.f32 %v1074, %v1087
      %v1092 = vadd.f32 %v1075, %v1088
      %v1093 = vadd.f32 %v1076, %v1089
      %v1094 = vadd.f32 %v1077, %v1090
      %v1095 = vld [vmem:[%s1060 + $0x2] sm:$0xff]
      %v1096 = vld [vmem:[%s1060 + $0xa] sm:$0xff]
      %v1097 = vld [vmem:[%s1060 + $0x1a] sm:$0xff]
      %v1098 = vld [vmem:[%s1060 + $0x22] sm:$0xff]
      %v1099 = vld [vmem:[%s2 + $0x5] sm:$0x1]
      %v1100 = vlaneseq
      %v1101 = vshrl.u32 %v1100, 7
      %v1102 = vsub.s32 0, %v1101
      %v1103 = vrot.slane %v1099, %v1102
      %v1104 = vmul.f32 %v1095, %v1103
      %v1105 = vmul.f32 %v1096, %v1103
      %v1106 = vmul.f32 %v1097, %v1103
      %v1107 = vmul.f32 %v1098, %v1103
      %v1108 = vadd.f32 %v1091, %v1104
      %v1109 = vadd.f32 %v1092, %v1105
      %v1110 = vadd.f32 %v1093, %v1106
      %v1111 = vadd.f32 %v1094, %v1107
      %v1112 = vld [vmem:[%s1006] sm:$0xff]
      %v1113 = vld [vmem:[%s1006 + $0x8] sm:$0xff]
      %v1114 = vld [vmem:[%s1006 + $0x18] sm:$0xff]
      %v1115 = vld [vmem:[%s1006 + $0x20] sm:$0xff]
      %v1116 = vld [vmem:[%s2 + $0x6] sm:$0x1]
      %v1117 = vlaneseq
      %v1118 = vshrl.u32 %v1117, 7
      %v1119 = vsub.s32 0, %v1118
      %v1120 = vrot.slane %v1116, %v1119
      %v1121 = vmul.f32 %v1112, %v1120
      %v1122 = vmul.f32 %v1113, %v1120
      %v1123 = vmul.f32 %v1114, %v1120
      %v1124 = vmul.f32 %v1115, %v1120
      %v1125 = vadd.f32 %v1108, %v1121
      %v1126 = vadd.f32 %v1109, %v1122
      %v1127 = vadd.f32 %v1110, %v1123
      %v1128 = vadd.f32 %v1111, %v1124
      %v1129 = vld [vmem:[%s1006 + $0x1] sm:$0xff]
      %v1130 = vld [vmem:[%s1006 + $0x9] sm:$0xff]
      %v1131 = vld [vmem:[%s1006 + $0x19] sm:$0xff]
      %v1132 = vld [vmem:[%s1006 + $0x21] sm:$0xff]
      %v1133 = vld [vmem:[%s2 + $0x7] sm:$0x1]
      %v1134 = vlaneseq
      %v1135 = vshrl.u32 %v1134, 7
      %v1136 = vsub.s32 0, %v1135
      %v1137 = vrot.slane %v1133, %v1136
      %v1138 = vmul.f32 %v1129, %v1137
      %v1139 = vmul.f32 %v1130, %v1137
      %v1140 = vmul.f32 %v1131, %v1137
      %v1141 = vmul.f32 %v1132, %v1137
      %v1142 = vadd.f32 %v1125, %v1138
      %v1143 = vadd.f32 %v1126, %v1139
      %v1144 = vadd.f32 %v1127, %v1140
      %v1145 = vadd.f32 %v1128, %v1141
      %v1146 = vld [vmem:[%s1006 + $0x2] sm:$0xff]
      %v1147 = vld [vmem:[%s1006 + $0xa] sm:$0xff]
      %v1148 = vld [vmem:[%s1006 + $0x1a] sm:$0xff]
      %v1149 = vld [vmem:[%s1006 + $0x22] sm:$0xff]
      %v1150 = vld [vmem:[%s2 + $0x8] sm:$0x1]
      %v1151 = vlaneseq
      %v1152 = vshrl.u32 %v1151, 7
      %v1153 = vsub.s32 0, %v1152
      %v1154 = vrot.slane %v1150, %v1153
      %v1155 = vmul.f32 %v1146, %v1154
      %v1156 = vmul.f32 %v1147, %v1154
      %v1157 = vmul.f32 %v1148, %v1154
      %v1158 = vmul.f32 %v1149, %v1154
      %v1159 = vadd.f32 %v1142, %v1155
      %v1160 = vadd.f32 %v1143, %v1156
      %v1161 = vadd.f32 %v1144, %v1157
      %v1162 = vadd.f32 %v1145, %v1158
      %v1163 = vadd.f32 %v1159, %v733
      %v1164 = vadd.f32 %v1160, %v733
      %v1165 = vadd.f32 %v1161, %v733
      %v1166 = vadd.f32 %v1162, %v733
      %v1167 = vmax.f32 %v1163, 0.0
      %v1168 = vmax.f32 %v1164, 0.0
      %v1169 = vmax.f32 %v1165, 0.0
      %v1170 = vmax.f32 %v1166, 0.0
      %v1172 = vsel %vm759, %v1167, 0
      %v1175 = vsel %vm759, %v1168, 0
      %v1178 = vsel %vm759, %v1169, 0
      %v1181 = vsel %vm759, %v1170, 0
      %1183 = vmatprep.subr.mxu0 0.0
      %1184 = vmatpush1.msra.mxu0 %v798
      %1185 = vmatprep.subr.mxu0 0.0
      %1186 = vmatpush1.msra.mxu0 0.0
      %1187 = vmatprep.subr.mxu0 0.0
      %1188 = vmatpush1.msra.mxu0 0.0
      %1189 = vmatprep.subr.mxu0 0.0
      %1190 = vmatpush1.msra.mxu0 0.0
      %1191 = vmatprep.subr.mxu0 0.0
      %1192 = vmatpush1.msra.mxu0 0.0
      %1193 = vmatprep.subr.mxu0 0.0
      %1194 = vmatpush1.msra.mxu0 0.0
      %1195 = vmatprep.subr.mxu0 0.0
      %1196 = vmatpush1.msra.mxu0 0.0
      %1197 = vmatprep.subr.mxu0 0.0
      %1198 = vmatpush1.msra.mxu0 0.0
      %1199 = vmatprep.subr.mxu0 0.0
      %1200 = vmatpush1.msra.mxu0 0.0
      %1201 = vmatprep.subr.mxu0 0.0
      %1202 = vmatpush1.msra.mxu0 0.0
      %1203 = vmatprep.subr.mxu0 0.0
      %1204 = vmatpush1.msra.mxu0 0.0
      %1205 = vmatprep.subr.mxu0 0.0
      %1206 = vmatpush1.msra.mxu0 0.0
      %1207 = vmatprep.subr.mxu0 0.0
      %1208 = vmatpush1.msra.mxu0 0.0
      %1209 = vmatprep.subr.mxu0 0.0
      %1210 = vmatpush1.msra.mxu0 0.0
      %1211 = vmatprep.subr.mxu0 0.0
      %1212 = vmatpush1.msra.mxu0 0.0
      %1213 = vmatprep.subr.mxu0 0.0
      %1214 = vmatpush1.msra.mxu0 0.0
      %1215 = vmatprep.subr.mxu0 0.0
      %1216 = vmatpush1.msra.mxu0 0.0
      %1217 = vmatprep.subr.mxu0 0.0
      %1218 = vmatpush1.msra.mxu0 0.0
      %1219 = vmatprep.subr.mxu0 0.0
      %1220 = vmatpush1.msra.mxu0 0.0
      %1221 = vmatprep.subr.mxu0 0.0
      %1222 = vmatpush1.msra.mxu0 0.0
      %1223 = vmatprep.subr.mxu0 0.0
      %1224 = vmatpush1.msra.mxu0 0.0
      %1225 = vmatprep.subr.mxu0 0.0
      %1226 = vmatpush1.msra.mxu0 0.0
      %1227 = vmatprep.subr.mxu0 0.0
      %1228 = vmatpush1.msra.mxu0 0.0
      %1229 = vmatprep.subr.mxu0 0.0
      %1230 = vmatpush1.msra.mxu0 0.0
      %1231 = vmatprep.subr.mxu0 0.0
      %1232 = vmatpush1.msra.mxu0 0.0
      %1233 = vmatprep.subr.mxu0 0.0
      %1234 = vmatpush1.msra.mxu0 0.0
      %1235 = vmatprep.subr.mxu0 0.0
      %1236 = vmatpush1.msra.mxu0 0.0
      %1237 = vmatprep.subr.mxu0 0.0
      %1238 = vmatpush1.msra.mxu0 0.0
      %1239 = vmatprep.subr.mxu0 0.0
      %1240 = vmatpush1.msra.mxu0 0.0
      %1241 = vmatprep.subr.mxu0 0.0
      %1242 = vmatpush1.msra.mxu0 0.0
      %1243 = vmatprep.subr.mxu0 0.0
      %1244 = vmatpush1.msra.mxu0 0.0
      %1245 = vmatprep.subr.mxu0 0.0
      %1246 = vmatpush1.msra.mxu0 0.0
      %1247 = vmatprep.mubr.f32.mxu0 0.0
      %1248 = vmatmul.mubr.f32.gmra.mrb[0].mxu0 %v1172
      %v1249 = vpop.f32.mrb[0].mxu0
      %v1250 = vadd.f32 0.0, %v1249
      %v1251 = vpop.f32.mrb[0].mxu0
      %1252 = vmatprep.mubr.f32.mxu0 0.0
      %1253 = vmatmul.mubr.f32.gmra.mrb[0].mxu0 %v1175
      %v1254 = vpop.f32.mrb[0].mxu0
      %v1255 = vadd.f32 0.0, %v1254
      %v1256 = vpop.f32.mrb[0].mxu0
      %1257 = vmatprep.mubr.f32.mxu0 0.0
      %1258 = vmatmul.mubr.f32.gmra.mrb[0].mxu0 %v1178
      %v1259 = vpop.f32.mrb[0].mxu0
      %v1260 = vadd.f32 0.0, %v1259
      %v1261 = vpop.f32.mrb[0].mxu0
      %1262 = vmatprep.mubr.f32.mxu0 0.0
      %1263 = vmatmul.mubr.f32.gmra.mrb[0].mxu0 %v1181
      %v1264 = vpop.f32.mrb[0].mxu0
      %v1265 = vadd.f32 0.0, %v1264
      %v1266 = vpop.f32.mrb[0].mxu0
      %1267 = vdwg.mxu0
      %v1268 = vmul.f32 %v1250, %v929
      %v1269 = vmul.f32 %v1255, %v929
      %v1270 = vmul.f32 %v1260, %v929
      %v1271 = vmul.f32 %v1265, %v929
      %v1272 = vadd.f32 %v1268, %v947
      %v1273 = vadd.f32 %v1269, %v947
      %v1274 = vadd.f32 %v1270, %v947
      %v1275 = vadd.f32 %v1271, %v947
      %v1276 = vmax.f32 %v1272, 0.0
      %v1277 = vmax.f32 %v1273, 0.0
      %v1278 = vmax.f32 %v1274, 0.0
      %v1279 = vmax.f32 %v1275, 0.0
      %1280 = vst.msk [vmem:[%s363 + $0x60] sm:$0xff] %vm973, %v1276
      %1281 = vst.msk [vmem:[%s363 + $0x68] sm:$0xff] %vm973, %v1277
      %1282 = vst.msk [vmem:[%s363 + $0x70] sm:$0xff] %vm973, %v1278
      %1283 = vst.msk [vmem:[%s363 + $0x78] sm:$0xff] %vm973, %v1279
      %s1284 = smul.u32 %s22, 2
      %s1285 = sadd.s32 %s1284, %s23
      %p1286 = scmp.lt.s32.totalorder %s1285, 3
      %s1287 = scalar_select %p1286, %s1285, 3
      %s1288 = smul.addr %s1287, 16
      %s1289 = smul.addr %s1288, 8
      %s1290 = scalar_lea.vmem %s7, %s1289
      // Predicated region
      $region49: #{tpu_custom_call.1} parent=47 // pred_check
        %p1291 = pneg %p215
      $region50: #{tpu_custom_call.1} parent=47 // pred_check_branch
        %1293 = sbr.rel (%p1291) target = $region52
      $region51: #{tpu_custom_call.1} parent=47 // pred_region
        %s1294 = smul.u32 %s22, 2
        %s1295 = sadd.s32 %s1294, %s23
      $region52: #{tpu_custom_call.1} parent=47 // pred_fallthru
        _
    $region48: #{tpu_custom_call.1} parent=5 // pred_fallthru
      _
    %p1296 = scmp.le.s32.totalorder 2, %s13
    // Predicated region
    $region53: #{tpu_custom_call.1} parent=5 // pred_check
      %p1297 = pneg %p1296
    $region54: #{tpu_custom_call.1} parent=5 // pred_check_branch
      %1299 = sbr.rel (%p1297) target = $region56
    $region55: #{tpu_custom_call.1} parent=5 // pred_region
      %s1300 = ssub.s32 %s13, 2
      // Predicated region
      $region57: #{tpu_custom_call.1} parent=55 // pred_check
        %p1301 = pneg %p221
      $region58: #{tpu_custom_call.1} parent=55 // pred_check_branch
        %1303 = sbr.rel (%p1301) target = $region60
      $region59: #{tpu_custom_call.1} parent=55 // pred_region
        %s1304 = smul.u32 %s24, 2
        %s1305 = sadd.s32 %s1304, %s25
        %p1306 = scmp.lt.s32.totalorder %s1305, 3
        %s1307 = scalar_select %p1306, %s1305, 3
        %s1308 = smul.addr %s1307, 16
        %s1309 = smul.addr %s1308, 8
        %s1310 = scalar_lea.vmem %s7, %s1309
      $region60: #{tpu_custom_call.1} parent=55 // pred_fallthru
        _
    $region56: #{tpu_custom_call.1} parent=5 // pred_fallthru
      _
  $region6: #{tpu_custom_call.1} parent=0 // loop_footer
    %s17 = sadd.s32 1, %s13
  $region7: #{tpu_custom_call.1} parent=0 // loop_footer_branch
    %12 = sbr.rel target = $region3
  $region8: #{tpu_custom_call.1} parent=0 // loop_exit
    _

</llo_original>
